<compile_context>
chip_gen: v5e
topology: v5e:2x2
jax: 0.10.0
libtpu: 0.0.40
codegen_flags: <defaults>
</compile_context>

<pallas_src>
import math

import jax
import jax.numpy as jnp
from jax.experimental import pallas as pl
from jax.experimental.pallas import tpu as pltpu

L = 15                 # true feature width of the MLP
LP = 16                # L padded to a sublane multiple (pad rows/cols are zero)
EPS = 1e-8
SLAB_ROWS = 4 * LP     # w2 | w3 | column-packed vectors | [w4 row ; scalar row ; pad]
TILE_B_MAX = 8192      # batch tile on the lane axis; multiple of 256, VMEM-safe on all gens
INV_SQRT_L = L ** -0.5


# ----------------------------- kernel ---------------------------------------

def _silu(v):
    # v * sigmoid(v) == 0.5 * v * (1 + tanh(0.5 * v)); single EUP push + 2 VALU ops.
    return 0.5 * v * (1.0 + jnp.tanh(0.5 * v))


def _dot(a, b):
    return jnp.dot(a, b, preferred_element_type=jnp.float32,
                   precision=jax.lax.Precision.HIGHEST)


def _rmsnorm(h, scale, sumsq):
    # h: (LP, B) features on sublanes; sumsq: (1, B) sum of squares over the 15 features.
    # RMSNorm(p=-1): rms = ||h||_2 / sqrt(L); y = scale * h / (rms + eps)
    rms = jnp.sqrt(sumsq) * INV_SQRT_L
    inv = pl.reciprocal(rms + EPS)        # exact; only (1, B) wide so VPU cost is tiny
    return scale * (h * inv)


def mlp_kernel(x_ref, p_ref, o_ref):
    x = x_ref[...]                                     # (1, TILE_B), batch on lanes

    w2 = p_ref[0 * LP:1 * LP, :]                       # (LP, LP)
    w3 = p_ref[1 * LP:2 * LP, :]                       # (LP, LP)
    vec = p_ref[2 * LP:3 * LP, :]                      # column-packed per-feature vectors
    w1 = vec[:, 0:1]
    b1 = vec[:, 1:2]
    s1 = vec[:, 2:3]
    b2 = vec[:, 3:4]
    s2 = vec[:, 4:5]
    b3 = vec[:, 5:6]
    s3 = vec[:, 6:7]
    w4row = p_ref[3 * LP:3 * LP + 1, :]                # (1, LP) layer-4 weights as a row
    sc = p_ref[3 * LP + 1:3 * LP + 2, :]               # (1, LP) packed scalars
    b4 = sc[:, 0:1]
    sw1sq = sc[:, 1:2]                                 # Σ w1^2
    swb = sc[:, 2:3]                                   # Σ w1*b1
    sbsq = sc[:, 3:4]                                  # Σ b1^2

    ones_row = jnp.ones((1, LP), jnp.float32)

    # layer 1: Linear(1 -> L) is an outer product -> plain VPU broadcast.
    # Its sumsq is rank-1 in x, so compute it analytically on the (1, B) row.
    h = w1 * x + b1                                    # (LP, TILE_B)
    ss1 = (x * x) * sw1sq + x * (2.0 * swb) + sbsq     # (1, TILE_B)
    h = _silu(_rmsnorm(h, s1, ss1))

    # layer 2: Linear(L -> L) on the MXU, N = TILE_B; sumsq reduce also on the MXU.
    h = _dot(w2, h) + b2
    h = _silu(_rmsnorm(h, s2, _dot(ones_row, h * h)))

    # layer 3
    h = _dot(w3, h) + b3
    h = _silu(_rmsnorm(h, s3, _dot(ones_row, h * h)))

    # layer 4: Linear(L -> 1) as a (1,LP)x(LP,B) MXU matmul.
    y = _dot(w4row, h) + b4                            # (1, TILE_B)
    o_ref[...] = _silu(y).astype(o_ref.dtype)


# ----------------------------- wrapper ---------------------------------------

def pack_params(p):
    """Pack all weights/biases/scales into one (64, 16) f32 slab (zero-padded)."""
    slab = jnp.zeros((SLAB_ROWS, LP), jnp.float32)
    slab = slab.at[0:L, 0:L].set(p["w2"])              # rows [0, LP)
    slab = slab.at[LP:LP + L, 0:L].set(p["w3"])        # rows [LP, 2LP)
    base = 2 * LP                                      # column-packed vectors
    slab = slab.at[base:base + L, 0].set(p["w1"][:, 0])
    slab = slab.at[base:base + L, 1].set(p["b1"])
    slab = slab.at[base:base + L, 2].set(p["s1"])
    slab = slab.at[base:base + L, 3].set(p["b2"])
    slab = slab.at[base:base + L, 4].set(p["s2"])
    slab = slab.at[base:base + L, 5].set(p["b3"])
    slab = slab.at[base:base + L, 6].set(p["s3"])
    r4 = 3 * LP
    slab = slab.at[r4, 0:L].set(p["w4"][0, :])         # w4 as a lane row for the MXU
    w1v = p["w1"][:, 0]
    b1v = p["b1"]
    slab = slab.at[r4 + 1, 0].set(p["b4"][0])
    slab = slab.at[r4 + 1, 1].set(jnp.sum(w1v * w1v))
    slab = slab.at[r4 + 1, 2].set(jnp.sum(w1v * b1v))
    slab = slab.at[r4 + 1, 3].set(jnp.sum(b1v * b1v))
    return slab


def _round_up(n, m):
    return m * ((n + m - 1) // m)


def _choose_tile(B, tile_b_max=TILE_B_MAX):
    """Pick a 256-aligned batch tile. Large tiles amortize per-step overhead; when a
    single tile would cover the whole batch, split into two balanced tiles so the
    'parallel' axis can shard across both TensorCores on v7x."""
    b_al = _round_up(max(B, 1), 256)
    if b_al <= 256:
        return 256
    if b_al <= tile_b_max:
        return max(256, _round_up(b_al // 2, 256))
    return tile_b_max


def one_layer_net_forward(x, params, tile_b=None):
    B = x.shape[0]
    if tile_b is None:
        tile_b = _choose_tile(B)
    n_tiles = max(1, pl.cdiv(B, tile_b))
    b_pad = n_tiles * tile_b

    # batch goes on the lane axis; pad only the tail (no full-size zero-init copy)
    xt = x.reshape(1, B).astype(jnp.float32)
    if b_pad != B:
        xt = jnp.pad(xt, ((0, 0), (0, b_pad - B)))
    slab = pack_params(params)

    # NOTE: with TILE_B_MAX=8192 the per-tile working set is a few MiB, comfortably
    # under the default scoped VMEM on v5e (16 MiB) / v6e / v7x (32 MiB); no explicit
    # vmem_limit_bytes is needed. Revisit if TILE_B_MAX is raised past ~16K.
    out_t = pl.pallas_call(
        mlp_kernel,
        out_shape=jax.ShapeDtypeStruct((1, b_pad), jnp.float32),
        grid_spec=pltpu.PrefetchScalarGridSpec(
            num_scalar_prefetch=0,
            grid=(n_tiles,),
            in_specs=[
                pl.BlockSpec((1, tile_b), lambda i: (0, i)),        # x batch tile
                pl.BlockSpec((SLAB_ROWS, LP), lambda i: (0, 0)),    # resident param slab
            ],
            out_specs=pl.BlockSpec((1, tile_b), lambda i: (0, i)),
        ),
        compiler_params=pltpu.CompilerParams(
            dimension_semantics=("parallel",)),
    )(xt, slab)

    return out_t[0, :B].reshape(B, 1)


# ----------------------------- init + reference ------------------------------

def init_params(key):
    # Matches torch init: weights ~ N(0, (0.02/sqrt(L))^2), biases = 0 (zero_bias=True),
    # RMSNorm scales = 1. Weights kept in PyTorch (out, in) layout.
    N = 0.02
    std = N / math.sqrt(L)
    k1, k2, k3, k4 = jax.random.split(key, 4)
    return {
        "w1": jax.random.normal(k1, (L, 1), jnp.float32) * std,
        "b1": jnp.zeros((L,), jnp.float32),
        "s1": jnp.ones((L,), jnp.float32),
        "w2": jax.random.normal(k2, (L, L), jnp.float32) * std,
        "b2": jnp.zeros((L,), jnp.float32),
        "s2": jnp.ones((L,), jnp.float32),
        "w3": jax.random.normal(k3, (L, L), jnp.float32) * std,
        "b3": jnp.zeros((L,), jnp.float32),
        "s3": jnp.ones((L,), jnp.float32),
        "w4": jax.random.normal(k4, (1, L), jnp.float32) * std,
        "b4": jnp.zeros((1,), jnp.float32),
    }


def ref_forward(x, p):
    # pure-JAX reference (batch-major), same math as the torch module
    def rmsnorm(v, scale):
        norm = jnp.linalg.norm(v, axis=-1, keepdims=True)
        rms = norm * (L ** -0.5)
        return scale * (v / (rms + EPS))

    h = x * p["w1"][:, 0][None, :] + p["b1"][None, :]          # Linear(1->L)
    h = jax.nn.silu(rmsnorm(h, p["s1"]))
    h = h @ p["w2"].T + p["b2"][None, :]
    h = jax.nn.silu(rmsnorm(h, p["s2"]))
    h = h @ p["w3"].T + p["b3"][None, :]
    h = jax.nn.silu(rmsnorm(h, p["s3"]))
    y = jnp.sum(h * p["w4"][0][None, :], axis=-1, keepdims=True) + p["b4"][None, :]
    return jax.nn.silu(y)                                       # Linear(L->1)


# ----------------------------- demo -------------------------------------------

if __name__ == "__main__":
    key = jax.random.PRNGKey(0)
    pkey, xkey = jax.random.split(key)
    params = init_params(pkey)

    B = 8
    x = jax.random.normal(xkey, (B, 1), jnp.float32)

    out = one_layer_net_forward(x, params)
    out = jax.block_until_ready(out)

    expected = ref_forward(x, params)
    assert out.shape == (B, 1)
    assert jnp.allclose(out, expected, atol=1e-5, rtol=1e-5), float(
        jnp.max(jnp.abs(out - expected)))
    print("KERNEL_OK")
</pallas_src>

<mosaic_0001>
module attributes {stable_mosaic.version = 11 : i64} {
  func.func @mlp_kernel(%arg0: i32, %arg1: memref<1x256xf32, #tpu.memory_space<vmem>>, %arg2: memref<64x16xf32, #tpu.memory_space<vmem>>, %arg3: memref<1x256xf32, #tpu.memory_space<vmem>>) attributes {dimension_semantics = [#tpu.dimension_semantics<parallel>], iteration_bounds = array<i64: 1>, scalar_prefetch = 0 : i64, scratch_operands = 0 : i64, tpu.core_type = #tpu.core_type<tc>, window_params = [{transform_indices = @transform_0, window_bounds = array<i64: 1, 256>}, {pipeline_mode = #tpu.pipeline_mode<synchronous>, transform_indices = @transform_1, window_bounds = array<i64: 64, 16>}, {transform_indices = @transform_2, window_bounds = array<i64: 1, 256>}]} {
    %c0 = arith.constant 0 : index
    %c0_0 = arith.constant 0 : index
    %0 = vector.load %arg1[%c0, %c0_0] : memref<1x256xf32, #tpu.memory_space<vmem>>, vector<1x256xf32>
    %c0_1 = arith.constant 0 : index
    %c0_2 = arith.constant 0 : index
    %1 = vector.load %arg2[%c0_1, %c0_2] : memref<64x16xf32, #tpu.memory_space<vmem>>, vector<16x16xf32>
    %c16 = arith.constant 16 : index
    %c0_3 = arith.constant 0 : index
    %2 = vector.load %arg2[%c16, %c0_3] : memref<64x16xf32, #tpu.memory_space<vmem>>, vector<16x16xf32>
    %c32 = arith.constant 32 : index
    %c0_4 = arith.constant 0 : index
    %3 = vector.load %arg2[%c32, %c0_4] : memref<64x16xf32, #tpu.memory_space<vmem>>, vector<16x16xf32>
    %4 = vector.extract_strided_slice %3 {offsets = [0, 0], sizes = [16, 1], strides = [1, 1]} : vector<16x16xf32> to vector<16x1xf32>
    %5 = vector.extract_strided_slice %3 {offsets = [0, 1], sizes = [16, 1], strides = [1, 1]} : vector<16x16xf32> to vector<16x1xf32>
    %6 = vector.extract_strided_slice %3 {offsets = [0, 2], sizes = [16, 1], strides = [1, 1]} : vector<16x16xf32> to vector<16x1xf32>
    %7 = vector.extract_strided_slice %3 {offsets = [0, 3], sizes = [16, 1], strides = [1, 1]} : vector<16x16xf32> to vector<16x1xf32>
    %8 = vector.extract_strided_slice %3 {offsets = [0, 4], sizes = [16, 1], strides = [1, 1]} : vector<16x16xf32> to vector<16x1xf32>
    %9 = vector.extract_strided_slice %3 {offsets = [0, 5], sizes = [16, 1], strides = [1, 1]} : vector<16x16xf32> to vector<16x1xf32>
    %10 = vector.extract_strided_slice %3 {offsets = [0, 6], sizes = [16, 1], strides = [1, 1]} : vector<16x16xf32> to vector<16x1xf32>
    %c48 = arith.constant 48 : index
    %c0_5 = arith.constant 0 : index
    %11 = vector.load %arg2[%c48, %c0_5] : memref<64x16xf32, #tpu.memory_space<vmem>>, vector<1x16xf32>
    %c49 = arith.constant 49 : index
    %c0_6 = arith.constant 0 : index
    %12 = vector.load %arg2[%c49, %c0_6] : memref<64x16xf32, #tpu.memory_space<vmem>>, vector<1x16xf32>
    %13 = vector.extract_strided_slice %12 {offsets = [0, 0], sizes = [1, 1], strides = [1, 1]} : vector<1x16xf32> to vector<1x1xf32>
    %14 = vector.extract_strided_slice %12 {offsets = [0, 1], sizes = [1, 1], strides = [1, 1]} : vector<1x16xf32> to vector<1x1xf32>
    %15 = vector.extract_strided_slice %12 {offsets = [0, 2], sizes = [1, 1], strides = [1, 1]} : vector<1x16xf32> to vector<1x1xf32>
    %16 = vector.extract_strided_slice %12 {offsets = [0, 3], sizes = [1, 1], strides = [1, 1]} : vector<1x16xf32> to vector<1x1xf32>
    %cst = arith.constant 1.000000e+00 : f32
    %17 = vector.broadcast %cst : f32 to vector<1x16xf32>
    %18 = vector.broadcast %4 : vector<16x1xf32> to vector<16x256xf32>
    %19 = vector.broadcast %0 : vector<1x256xf32> to vector<16x256xf32>
    %20 = arith.mulf %18, %19 : vector<16x256xf32>
    %21 = vector.broadcast %5 : vector<16x1xf32> to vector<16x256xf32>
    %22 = arith.addf %20, %21 : vector<16x256xf32>
    %23 = arith.mulf %0, %0 : vector<1x256xf32>
    %24 = vector.broadcast %14 : vector<1x1xf32> to vector<1x256xf32>
    %25 = arith.mulf %23, %24 : vector<1x256xf32>
    %cst_7 = arith.constant 2.000000e+00 : f32
    %26 = vector.broadcast %cst_7 : f32 to vector<1x1xf32>
    %27 = arith.mulf %26, %15 : vector<1x1xf32>
    %28 = vector.broadcast %27 : vector<1x1xf32> to vector<1x256xf32>
    %29 = arith.mulf %0, %28 : vector<1x256xf32>
    %30 = arith.addf %25, %29 : vector<1x256xf32>
    %31 = vector.broadcast %16 : vector<1x1xf32> to vector<1x256xf32>
    %32 = arith.addf %30, %31 : vector<1x256xf32>
    %33 = math.sqrt %32 : vector<1x256xf32>
    %cst_8 = arith.constant 0.258198887 : f32
    %34 = vector.broadcast %cst_8 : f32 to vector<1x256xf32>
    %35 = arith.mulf %33, %34 : vector<1x256xf32>
    %cst_9 = arith.constant 9.99999993E-9 : f32
    %36 = vector.broadcast %cst_9 : f32 to vector<1x256xf32>
    %37 = arith.addf %35, %36 : vector<1x256xf32>
    %38 = tpu.reciprocal %37 : vector<1x256xf32> -> vector<1x256xf32>
    %39 = vector.broadcast %38 : vector<1x256xf32> to vector<16x256xf32>
    %40 = arith.mulf %22, %39 : vector<16x256xf32>
    %41 = vector.broadcast %6 : vector<16x1xf32> to vector<16x256xf32>
    %42 = arith.mulf %41, %40 : vector<16x256xf32>
    %cst_10 = arith.constant 5.000000e-01 : f32
    %43 = vector.broadcast %cst_10 : f32 to vector<16x256xf32>
    %44 = arith.mulf %43, %42 : vector<16x256xf32>
    %cst_11 = arith.constant 5.000000e-01 : f32
    %45 = vector.broadcast %cst_11 : f32 to vector<16x256xf32>
    %46 = arith.mulf %45, %42 : vector<16x256xf32>
    %47 = math.tanh %46 : vector<16x256xf32>
    %cst_12 = arith.constant 1.000000e+00 : f32
    %48 = vector.broadcast %cst_12 : f32 to vector<16x256xf32>
    %49 = arith.addf %48, %47 : vector<16x256xf32>
    %50 = arith.mulf %44, %49 : vector<16x256xf32>
    %cst_13 = arith.constant dense<0.000000e+00> : vector<16x256xf32>
    %51 = tpu.matmul %1, %50, %cst_13 {dimension_numbers = #tpu.dot_dimension_numbers<[1], [0], [0], [1], [0, 0, 1, 1], [], []>, precision = #tpu.contract_precision<fp32>} : vector<16x16xf32>, vector<16x256xf32>, vector<16x256xf32> -> vector<16x256xf32>
    %52 = vector.broadcast %7 : vector<16x1xf32> to vector<16x256xf32>
    %53 = arith.addf %51, %52 : vector<16x256xf32>
    %54 = arith.mulf %53, %53 : vector<16x256xf32>
    %cst_14 = arith.constant dense<0.000000e+00> : vector<1x256xf32>
    %55 = tpu.matmul %17, %54, %cst_14 {dimension_numbers = #tpu.dot_dimension_numbers<[1], [0], [0], [1], [0, 0, 1, 1], [], []>, precision = #tpu.contract_precision<fp32>} : vector<1x16xf32>, vector<16x256xf32>, vector<1x256xf32> -> vector<1x256xf32>
    %56 = math.sqrt %55 : vector<1x256xf32>
    %cst_15 = arith.constant 0.258198887 : f32
    %57 = vector.broadcast %cst_15 : f32 to vector<1x256xf32>
    %58 = arith.mulf %56, %57 : vector<1x256xf32>
    %cst_16 = arith.constant 9.99999993E-9 : f32
    %59 = vector.broadcast %cst_16 : f32 to vector<1x256xf32>
    %60 = arith.addf %58, %59 : vector<1x256xf32>
    %61 = tpu.reciprocal %60 : vector<1x256xf32> -> vector<1x256xf32>
    %62 = vector.broadcast %61 : vector<1x256xf32> to vector<16x256xf32>
    %63 = arith.mulf %53, %62 : vector<16x256xf32>
    %64 = vector.broadcast %8 : vector<16x1xf32> to vector<16x256xf32>
    %65 = arith.mulf %64, %63 : vector<16x256xf32>
    %cst_17 = arith.constant 5.000000e-01 : f32
    %66 = vector.broadcast %cst_17 : f32 to vector<16x256xf32>
    %67 = arith.mulf %66, %65 : vector<16x256xf32>
    %cst_18 = arith.constant 5.000000e-01 : f32
    %68 = vector.broadcast %cst_18 : f32 to vector<16x256xf32>
    %69 = arith.mulf %68, %65 : vector<16x256xf32>
    %70 = math.tanh %69 : vector<16x256xf32>
    %cst_19 = arith.constant 1.000000e+00 : f32
    %71 = vector.broadcast %cst_19 : f32 to vector<16x256xf32>
    %72 = arith.addf %71, %70 : vector<16x256xf32>
    %73 = arith.mulf %67, %72 : vector<16x256xf32>
    %cst_20 = arith.constant dense<0.000000e+00> : vector<16x256xf32>
    %74 = tpu.matmul %2, %73, %cst_20 {dimension_numbers = #tpu.dot_dimension_numbers<[1], [0], [0], [1], [0, 0, 1, 1], [], []>, precision = #tpu.contract_precision<fp32>} : vector<16x16xf32>, vector<16x256xf32>, vector<16x256xf32> -> vector<16x256xf32>
    %75 = vector.broadcast %9 : vector<16x1xf32> to vector<16x256xf32>
    %76 = arith.addf %74, %75 : vector<16x256xf32>
    %77 = arith.mulf %76, %76 : vector<16x256xf32>
    %cst_21 = arith.constant dense<0.000000e+00> : vector<1x256xf32>
    %78 = tpu.matmul %17, %77, %cst_21 {dimension_numbers = #tpu.dot_dimension_numbers<[1], [0], [0], [1], [0, 0, 1, 1], [], []>, precision = #tpu.contract_precision<fp32>} : vector<1x16xf32>, vector<16x256xf32>, vector<1x256xf32> -> vector<1x256xf32>
    %79 = math.sqrt %78 : vector<1x256xf32>
    %cst_22 = arith.constant 0.258198887 : f32
    %80 = vector.broadcast %cst_22 : f32 to vector<1x256xf32>
    %81 = arith.mulf %79, %80 : vector<1x256xf32>
    %cst_23 = arith.constant 9.99999993E-9 : f32
    %82 = vector.broadcast %cst_23 : f32 to vector<1x256xf32>
    %83 = arith.addf %81, %82 : vector<1x256xf32>
    %84 = tpu.reciprocal %83 : vector<1x256xf32> -> vector<1x256xf32>
    %85 = vector.broadcast %84 : vector<1x256xf32> to vector<16x256xf32>
    %86 = arith.mulf %76, %85 : vector<16x256xf32>
    %87 = vector.broadcast %10 : vector<16x1xf32> to vector<16x256xf32>
    %88 = arith.mulf %87, %86 : vector<16x256xf32>
    %cst_24 = arith.constant 5.000000e-01 : f32
    %89 = vector.broadcast %cst_24 : f32 to vector<16x256xf32>
    %90 = arith.mulf %89, %88 : vector<16x256xf32>
    %cst_25 = arith.constant 5.000000e-01 : f32
    %91 = vector.broadcast %cst_25 : f32 to vector<16x256xf32>
    %92 = arith.mulf %91, %88 : vector<16x256xf32>
    %93 = math.tanh %92 : vector<16x256xf32>
    %cst_26 = arith.constant 1.000000e+00 : f32
    %94 = vector.broadcast %cst_26 : f32 to vector<16x256xf32>
    %95 = arith.addf %94, %93 : vector<16x256xf32>
    %96 = arith.mulf %90, %95 : vector<16x256xf32>
    %cst_27 = arith.constant dense<0.000000e+00> : vector<1x256xf32>
    %97 = tpu.matmul %11, %96, %cst_27 {dimension_numbers = #tpu.dot_dimension_numbers<[1], [0], [0], [1], [0, 0, 1, 1], [], []>, precision = #tpu.contract_precision<fp32>} : vector<1x16xf32>, vector<16x256xf32>, vector<1x256xf32> -> vector<1x256xf32>
    %98 = vector.broadcast %13 : vector<1x1xf32> to vector<1x256xf32>
    %99 = arith.addf %97, %98 : vector<1x256xf32>
    %cst_28 = arith.constant 5.000000e-01 : f32
    %100 = vector.broadcast %cst_28 : f32 to vector<1x256xf32>
    %101 = arith.mulf %100, %99 : vector<1x256xf32>
    %cst_29 = arith.constant 5.000000e-01 : f32
    %102 = vector.broadcast %cst_29 : f32 to vector<1x256xf32>
    %103 = arith.mulf %102, %99 : vector<1x256xf32>
    %104 = math.tanh %103 : vector<1x256xf32>
    %cst_30 = arith.constant 1.000000e+00 : f32
    %105 = vector.broadcast %cst_30 : f32 to vector<1x256xf32>
    %106 = arith.addf %105, %104 : vector<1x256xf32>
    %107 = arith.mulf %101, %106 : vector<1x256xf32>
    %c0_31 = arith.constant 0 : index
    %c0_32 = arith.constant 0 : index
    %108 = vector.load %arg3[%c0_31, %c0_32] : memref<1x256xf32, #tpu.memory_space<vmem>>, vector<1x256xf32>
    tpu.vector_store %arg3[%c0_31, %c0_32], %107 {strides = array<i32>} : memref<1x256xf32, #tpu.memory_space<vmem>>, vector<1x256xf32>,
    return
  }
  func.func @transform_0(%arg0: i32) -> (i32, i32) {
    %c0_i32 = arith.constant 0 : i32
    %c0_i32_0 = arith.constant 0 : i32
    return %c0_i32, %arg0 : i32, i32
  }
  func.func @transform_1(%arg0: i32) -> (i32, i32) {
    %c0_i32 = arith.constant 0 : i32
    %c0_i32_0 = arith.constant 0 : i32
    %c0_i32_1 = arith.constant 0 : i32
    return %c0_i32, %c0_i32_0 : i32, i32
  }
  func.func @transform_2(%arg0: i32) -> (i32, i32) {
    %c0_i32 = arith.constant 0 : i32
    %c0_i32_0 = arith.constant 0 : i32
    return %c0_i32, %arg0 : i32, i32
  }
}

</mosaic_0001>

<llo_original>
// kernel: tpu_custom_call.1
$region0: #{tpu_custom_call.1}
  #allocation0 [shape = 'u32[]', space=smem, size = 0x4, offset = 0x4, fixed_abs, tag = 'smem constant byte address 0x4 - core index']
  #allocation1 [shape = 'u32[72,128]{1,0:T(1,128)}', space=vmem, size = 0x9000, scoped, tag = 'internal scratch']
  %s0 = inlined_call_operand.vmem [shape: f32[1,256], index: 0, kind: input, shape index: {}]
  %s1 = inlined_call_operand.vmem [shape: f32[64,16], index: 1, kind: input, shape index: {}]
  %s2 = inlined_call_operand.hbm [shape: f32[1,256], index: 2, kind: output, shape index: {}]
  %s3 = sld [smem:[#allocation0]]
  $region18: #{tpu_custom_call.1} parent=0
    _
  %s5 = ssub.s32 1, %s3
  %s6 = scalar_select 0, %s5, %s3
  $region1: #{tpu_custom_call.1} parent=0
    #allocation2 [shape = 'u8[1024]{0}', space=vmem, size = 0x400, scoped, tag = 'output window, operand 0, single buffered']
    #allocation3 [shape = 's32[1]{0}', space=sflag, size = 0x4, scoped, tag = 'scoped memory for tpu_custom_call.1']
    %7 = vsyncpa [#allocation3], 0
    // Predicated region
    $region2: #{tpu_custom_call.1} parent=1 // pred_check
      _
    $region3: #{tpu_custom_call.1} parent=1 // pred_check_branch
      %9 = sbr.rel (0) target = $region5
    $region4: #{tpu_custom_call.1} parent=1 // pred_region
      _
    $region5: #{tpu_custom_call.1} parent=1 // pred_fallthru
      _
    // Predicated region
    $region6: #{tpu_custom_call.1} parent=1 // pred_check
      _
    $region7: #{tpu_custom_call.1} parent=1 // pred_check_branch
      %11 = sbr.rel (0) target = $region9
    $region8: #{tpu_custom_call.1} parent=1 // pred_region
      _
    $region9: #{tpu_custom_call.1} parent=1 // pred_fallthru
      _
    %v12 = vld [vmem:[%s0] sm:$0x3]
    %v13 = vld [vmem:[%s1] sm:$0xff]
    %v14 = vld [vmem:[%s1 + $0x8] sm:$0xff]
    %v15 = vld [vmem:[%s1 + $0x10] sm:$0xff]
    %v16 = vld [vmem:[%s1 + $0x18] sm:$0xff]
    %v17 = vld [vmem:[%s1 + $0x20] sm:$0xff]
    %v18 = vld [vmem:[%s1 + $0x28] sm:$0xff]
    %v19 = vld [vmem:[%s1 + $0x30] sm:$0x1]
    %v20 = vld [vmem:[%s1 + $0x31] sm:$0x1]
    %22 = vset.pattern.permute.xlu0 0
    %23 = vperm.xlu0 %22, %v17
    %v24 = vpop.permute.xlu0 %23
    %27 = vset.pattern.permute.xlu0 0
    %28 = vperm.xlu0 %27, %v18
    %v29 = vpop.permute.xlu0 %28
    %v32 = vperm.slane %v12, 0
    %v33 = vperm.slane %v12, 1
    %v36 = vmul.f32 %v24, %v32
    %v37 = vmul.f32 %v24, %v33
    %v38 = vmul.f32 %v29, %v32
    %v39 = vmul.f32 %v29, %v33
    %40 = vset.pattern.permute.xlu0 1
    %41 = vperm.xlu0 %40, %v17
    %v42 = vpop.permute.xlu0 %41
    %44 = vset.pattern.permute.xlu0 1
    %45 = vperm.xlu0 %44, %v18
    %v46 = vpop.permute.xlu0 %45
    %v48 = vadd.f32 %v36, %v42
    %v49 = vadd.f32 %v37, %v42
    %v50 = vadd.f32 %v38, %v46
    %v51 = vadd.f32 %v39, %v46
    %v52 = vmul.f32 %v12, %v12
    %54 = vset.pattern.permute.xlu0 1
    %55 = vperm.xlu0 %54, %v20
    %v56 = vpop.permute.xlu0 %55
    %v57 = vperm.slane %v56, 0
    %v59 = vmul.f32 %v52, %v57
    %v60 = vmul.f32 %v20, 2.0
    %62 = vset.pattern.permute.xlu0 2
    %63 = vperm.xlu0 %62, %v60
    %v64 = vpop.permute.xlu0 %63
    %v65 = vperm.slane %v64, 0
    %v67 = vmul.f32 %v12, %v65
    %v68 = vadd.f32 %v59, %v67
    %69 = vset.pattern.permute.xlu0 3
    %70 = vperm.xlu0 %69, %v20
    %v71 = vpop.permute.xlu0 %70
    %v72 = vperm.slane %v71, 0
    %v74 = vadd.f32 %v68, %v72
    %v75 = vrsqrt.pop %v74
    %v76 = vmul.f32 %v75, %v74
    %v77 = vmul.f32 %v76, %v75
    %v78 = vmul.f32 0.5, %v77
    %v79 = vsub.f32 1.5, %v78
    %v80 = vmul.f32 %v75, %v79
    %v81 = vmul.f32 %v74, %v80
    %vm82 = vcmp.eq.f32.partialorder %v74, inf
    %v83 = vsel %vm82, %v74, %v81
    %vm84 = vcmp.eq.f32.partialorder %v74, 0.0
    %v85 = vand.u32 %v74, 2147483648
    %v86 = vsel %vm84, %v85, %v83
    %v87 = vmul.f32 %v86, 0.2581989
    %v88 = vadd.f32 %v87, 1e-08
    %v89 = vrcp.pop %v88
    %v90 = vmul.f32 %v88, %v89
    %v91 = vsub.f32 1.0, %v90
    %v92 = vmul.f32 %v89, %v91
    %v93 = vadd.f32 %v89, %v92
    %vm94 = vweird.f32 %v88
    %vm95 = vweird.f32 %v89
    %vm96 = vmor %vm94, %vm95
    %v97 = vsel %vm96, %v89, %v93
    %v98 = vand.u32 2147483647, %v88
    %vm99 = vcmp.eq.f32.partialorder %v98, 8.507059e+37
    %v100 = vand.u32 %v88, 2147483648
    %v101 = vor.u32 1.1754944e-38, %v100
    %v102 = vsel %vm99, %v101, %v97
    %v104 = vperm.slane %v102, 0
    %v105 = vperm.slane %v102, 1
    %v108 = vmul.f32 %v48, %v104
    %v109 = vmul.f32 %v49, %v105
    %v110 = vmul.f32 %v50, %v104
    %v111 = vmul.f32 %v51, %v105
    %112 = vset.pattern.permute.xlu0 2
    %113 = vperm.xlu0 %112, %v17
    %v114 = vpop.permute.xlu0 %113
    %116 = vset.pattern.permute.xlu0 2
    %117 = vperm.xlu0 %116, %v18
    %v118 = vpop.permute.xlu0 %117
    %v120 = vmul.f32 %v114, %v108
    %v121 = vmul.f32 %v114, %v109
    %v122 = vmul.f32 %v118, %v110
    %v123 = vmul.f32 %v118, %v111
    %v124 = vmul.f32 %v120, 0.5
    %v125 = vmul.f32 %v121, 0.5
    %v126 = vmul.f32 %v122, 0.5
    %v127 = vmul.f32 %v123, 0.5
    %v128 = vtanh.pop %v124
    %v129 = vtanh.pop %v125
    %v130 = vtanh.pop %v126
    %v131 = vtanh.pop %v127
    %v132 = vadd.f32 %v128, 1.0
    %v133 = vadd.f32 %v129, 1.0
    %v134 = vadd.f32 %v130, 1.0
    %v135 = vadd.f32 %v131, 1.0
    %v136 = vmul.f32 %v124, %v132
    %v137 = vmul.f32 %v125, %v133
    %v138 = vmul.f32 %v126, %v134
    %v139 = vmul.f32 %v127, %v135
    %140 = vset.pattern.permute.xlu0 3
    %141 = vperm.xlu0 %140, %v17
    %v142 = vpop.permute.xlu0 %141
    %144 = vset.pattern.permute.xlu0 3
    %145 = vperm.xlu0 %144, %v18
    %v146 = vpop.permute.xlu0 %145
    %vm148 = vcmask 130048
    %v150 = vsel %vm148, %v13, 0
    %v153 = vsel %vm148, %v14, 0
    %155 = vmatpush.msra.mxu0 0.0
    %156 = vmatpush.msra.mxu0 0.0
    %157 = vmatpush.msra.mxu0 0.0
    %158 = vmatpush.msra.mxu0 0.0
    %159 = vmatpush.msra.mxu0 0.0
    %160 = vmatpush.msra.mxu0 0.0
    %161 = vmatpush.msra.mxu0 0.0
    %162 = vmatpush.msra.mxu0 0.0
    %163 = vmatpush.msra.mxu0 0.0
    %164 = vmatpush.msra.mxu0 0.0
    %165 = vmatpush.msra.mxu0 0.0
    %166 = vmatpush.msra.mxu0 0.0
    %167 = vmatpush.msra.mxu0 0.0
    %168 = vmatpush.msra.mxu0 0.0
    %v169 = vand.u32 %v138, 4294901760
    %170 = vmatpush.msra.mxu0 %v169
    %v171 = vand.u32 %v136, 4294901760
    %172 = vmatpush.msra.mxu0 %v171
    %v173 = vand.u32 %v150, 4294901760
    %v174 = vsub.f32 %v150, %v173
    %v175 = vand.u32 %v174, 4294901760
    %v176 = vsub.f32 %v174, %v175
    %v177 = vand.u32 %v176, 4294901760
    %178 = vmatmul.f32.gmra.mxu0 %v177
    %v179 = vpop.f32.mrf.mxu0
    %v180 = vadd.f32 %v142, %v179
    %v181 = vand.u32 %v153, 4294901760
    %v182 = vsub.f32 %v153, %v181
    %v183 = vand.u32 %v182, 4294901760
    %v184 = vsub.f32 %v182, %v183
    %v185 = vand.u32 %v184, 4294901760
    %186 = vmatmul.f32.gmra.mxu0 %v185
    %v187 = vpop.f32.mrf.mxu0
    %v188 = vadd.f32 %v146, %v187
    %189 = vdwg.mxu0
    %190 = vmatpush.msra.mxu0 0.0
    %191 = vmatpush.msra.mxu0 0.0
    %192 = vmatpush.msra.mxu0 0.0
    %193 = vmatpush.msra.mxu0 0.0
    %194 = vmatpush.msra.mxu0 0.0
    %195 = vmatpush.msra.mxu0 0.0
    %196 = vmatpush.msra.mxu0 0.0
    %197 = vmatpush.msra.mxu0 0.0
    %198 = vmatpush.msra.mxu0 0.0
    %199 = vmatpush.msra.mxu0 0.0
    %200 = vmatpush.msra.mxu0 0.0
    %201 = vmatpush.msra.mxu0 0.0
    %202 = vmatpush.msra.mxu0 0.0
    %203 = vmatpush.msra.mxu0 0.0
    %v204 = vand.u32 %v138, 4294901760
    %v205 = vsub.f32 %v138, %v204
    %v206 = vand.u32 %v205, 4294901760
    %v207 = vsub.f32 %v205, %v206
    %v208 = vand.u32 %v207, 4294901760
    %209 = vmatpush.msra.mxu0 %v208
    %v210 = vand.u32 %v136, 4294901760
    %v211 = vsub.f32 %v136, %v210
    %v212 = vand.u32 %v211, 4294901760
    %v213 = vsub.f32 %v211, %v212
    %v214 = vand.u32 %v213, 4294901760
    %215 = vmatpush.msra.mxu0 %v214
    %v216 = vand.u32 %v150, 4294901760
    %217 = vmatmul.f32.gmra.mxu0 %v216
    %v218 = vpop.f32.mrf.mxu0
    %v219 = vadd.f32 %v180, %v218
    %v220 = vand.u32 %v153, 4294901760
    %221 = vmatmul.f32.gmra.mxu0 %v220
    %v222 = vpop.f32.mrf.mxu0
    %v223 = vadd.f32 %v188, %v222
    %224 = vdwg.mxu0
    %225 = vmatpush.msra.mxu0 0.0
    %226 = vmatpush.msra.mxu0 0.0
    %227 = vmatpush.msra.mxu0 0.0
    %228 = vmatpush.msra.mxu0 0.0
    %229 = vmatpush.msra.mxu0 0.0
    %230 = vmatpush.msra.mxu0 0.0
    %231 = vmatpush.msra.mxu0 0.0
    %232 = vmatpush.msra.mxu0 0.0
    %233 = vmatpush.msra.mxu0 0.0
    %234 = vmatpush.msra.mxu0 0.0
    %235 = vmatpush.msra.mxu0 0.0
    %236 = vmatpush.msra.mxu0 0.0
    %237 = vmatpush.msra.mxu0 0.0
    %238 = vmatpush.msra.mxu0 0.0
    %v239 = vand.u32 %v138, 4294901760
    %v240 = vsub.f32 %v138, %v239
    %241 = vmatpush.msra.mxu0 %v240
    %v242 = vand.u32 %v136, 4294901760
    %v243 = vsub.f32 %v136, %v242
    %244 = vmatpush.msra.mxu0 %v243
    %v245 = vand.u32 %v150, 4294901760
    %v246 = vsub.f32 %v150, %v245
    %247 = vmatmul.f32.gmra.mxu0 %v246
    %v248 = vpop.f32.mrf.mxu0
    %v249 = vadd.f32 %v219, %v248
    %v250 = vand.u32 %v153, 4294901760
    %v251 = vsub.f32 %v153, %v250
    %252 = vmatmul.f32.gmra.mxu0 %v251
    %v253 = vpop.f32.mrf.mxu0
    %v254 = vadd.f32 %v223, %v253
    %255 = vdwg.mxu0
    %256 = vmatpush.msra.mxu0 0.0
    %257 = vmatpush.msra.mxu0 0.0
    %258 = vmatpush.msra.mxu0 0.0
    %259 = vmatpush.msra.mxu0 0.0
    %260 = vmatpush.msra.mxu0 0.0
    %261 = vmatpush.msra.mxu0 0.0
    %262 = vmatpush.msra.mxu0 0.0
    %263 = vmatpush.msra.mxu0 0.0
    %264 = vmatpush.msra.mxu0 0.0
    %265 = vmatpush.msra.mxu0 0.0
    %266 = vmatpush.msra.mxu0 0.0
    %267 = vmatpush.msra.mxu0 0.0
    %268 = vmatpush.msra.mxu0 0.0
    %269 = vmatpush.msra.mxu0 0.0
    %v270 = vand.u32 %v138, 4294901760
    %271 = vmatpush.msra.mxu0 %v270
    %v272 = vand.u32 %v136, 4294901760
    %273 = vmatpush.msra.mxu0 %v272
    %v274 = vand.u32 %v150, 4294901760
    %v275 = vsub.f32 %v150, %v274
    %v276 = vand.u32 %v275, 4294901760
    %277 = vmatmul.f32.gmra.mxu0 %v276
    %v278 = vpop.f32.mrf.mxu0
    %v279 = vadd.f32 %v249, %v278
    %v280 = vand.u32 %v153, 4294901760
    %v281 = vsub.f32 %v153, %v280
    %v282 = vand.u32 %v281, 4294901760
    %283 = vmatmul.f32.gmra.mxu0 %v282
    %v284 = vpop.f32.mrf.mxu0
    %v285 = vadd.f32 %v254, %v284
    %286 = vdwg.mxu0
    %287 = vmatpush.msra.mxu0 0.0
    %288 = vmatpush.msra.mxu0 0.0
    %289 = vmatpush.msra.mxu0 0.0
    %290 = vmatpush.msra.mxu0 0.0
    %291 = vmatpush.msra.mxu0 0.0
    %292 = vmatpush.msra.mxu0 0.0
    %293 = vmatpush.msra.mxu0 0.0
    %294 = vmatpush.msra.mxu0 0.0
    %295 = vmatpush.msra.mxu0 0.0
    %296 = vmatpush.msra.mxu0 0.0
    %297 = vmatpush.msra.mxu0 0.0
    %298 = vmatpush.msra.mxu0 0.0
    %299 = vmatpush.msra.mxu0 0.0
    %300 = vmatpush.msra.mxu0 0.0
    %v301 = vand.u32 %v138, 4294901760
    %v302 = vsub.f32 %v138, %v301
    %v303 = vand.u32 %v302, 4294901760
    %304 = vmatpush.msra.mxu0 %v303
    %v305 = vand.u32 %v136, 4294901760
    %v306 = vsub.f32 %v136, %v305
    %v307 = vand.u32 %v306, 4294901760
    %308 = vmatpush.msra.mxu0 %v307
    %v309 = vand.u32 %v150, 4294901760
    %310 = vmatmul.f32.gmra.mxu0 %v309
    %v311 = vpop.f32.mrf.mxu0
    %v312 = vadd.f32 %v279, %v311
    %v313 = vand.u32 %v153, 4294901760
    %314 = vmatmul.f32.gmra.mxu0 %v313
    %v315 = vpop.f32.mrf.mxu0
    %v316 = vadd.f32 %v285, %v315
    %317 = vdwg.mxu0
    %318 = vmatpush.msra.mxu0 0.0
    %319 = vmatpush.msra.mxu0 0.0
    %320 = vmatpush.msra.mxu0 0.0
    %321 = vmatpush.msra.mxu0 0.0
    %322 = vmatpush.msra.mxu0 0.0
    %323 = vmatpush.msra.mxu0 0.0
    %324 = vmatpush.msra.mxu0 0.0
    %325 = vmatpush.msra.mxu0 0.0
    %326 = vmatpush.msra.mxu0 0.0
    %327 = vmatpush.msra.mxu0 0.0
    %328 = vmatpush.msra.mxu0 0.0
    %329 = vmatpush.msra.mxu0 0.0
    %330 = vmatpush.msra.mxu0 0.0
    %331 = vmatpush.msra.mxu0 0.0
    %v332 = vand.u32 %v138, 4294901760
    %333 = vmatpush.msra.mxu0 %v332
    %v334 = vand.u32 %v136, 4294901760
    %335 = vmatpush.msra.mxu0 %v334
    %v336 = vand.u32 %v150, 4294901760
    %337 = vmatmul.f32.gmra.mxu0 %v336
    %v338 = vpop.f32.mrf.mxu0
    %v339 = vadd.f32 %v312, %v338
    %v340 = vand.u32 %v153, 4294901760
    %341 = vmatmul.f32.gmra.mxu0 %v340
    %v342 = vpop.f32.mrf.mxu0
    %v343 = vadd.f32 %v316, %v342
    %344 = vdwg.mxu0
    %345 = vmatpush.msra.mxu0 0.0
    %346 = vmatpush.msra.mxu0 0.0
    %347 = vmatpush.msra.mxu0 0.0
    %348 = vmatpush.msra.mxu0 0.0
    %349 = vmatpush.msra.mxu0 0.0
    %350 = vmatpush.msra.mxu0 0.0
    %351 = vmatpush.msra.mxu0 0.0
    %352 = vmatpush.msra.mxu0 0.0
    %353 = vmatpush.msra.mxu0 0.0
    %354 = vmatpush.msra.mxu0 0.0
    %355 = vmatpush.msra.mxu0 0.0
    %356 = vmatpush.msra.mxu0 0.0
    %357 = vmatpush.msra.mxu0 0.0
    %358 = vmatpush.msra.mxu0 0.0
    %v359 = vand.u32 %v139, 4294901760
    %360 = vmatpush.msra.mxu0 %v359
    %v361 = vand.u32 %v137, 4294901760
    %362 = vmatpush.msra.mxu0 %v361
    %v363 = vand.u32 %v150, 4294901760
    %v364 = vsub.f32 %v150, %v363
    %v365 = vand.u32 %v364, 4294901760
    %v366 = vsub.f32 %v364, %v365
    %v367 = vand.u32 %v366, 4294901760
    %368 = vmatmul.f32.gmra.mxu0 %v367
    %v369 = vpop.f32.mrf.mxu0
    %v370 = vadd.f32 %v142, %v369
    %v371 = vand.u32 %v153, 4294901760
    %v372 = vsub.f32 %v153, %v371
    %v373 = vand.u32 %v372, 4294901760
    %v374 = vsub.f32 %v372, %v373
    %v375 = vand.u32 %v374, 4294901760
    %376 = vmatmul.f32.gmra.mxu0 %v375
    %v377 = vpop.f32.mrf.mxu0
    %v378 = vadd.f32 %v146, %v377
    %379 = vdwg.mxu0
    %380 = vmatpush.msra.mxu0 0.0
    %381 = vmatpush.msra.mxu0 0.0
    %382 = vmatpush.msra.mxu0 0.0
    %383 = vmatpush.msra.mxu0 0.0
    %384 = vmatpush.msra.mxu0 0.0
    %385 = vmatpush.msra.mxu0 0.0
    %386 = vmatpush.msra.mxu0 0.0
    %387 = vmatpush.msra.mxu0 0.0
    %388 = vmatpush.msra.mxu0 0.0
    %389 = vmatpush.msra.mxu0 0.0
    %390 = vmatpush.msra.mxu0 0.0
    %391 = vmatpush.msra.mxu0 0.0
    %392 = vmatpush.msra.mxu0 0.0
    %393 = vmatpush.msra.mxu0 0.0
    %v394 = vand.u32 %v139, 4294901760
    %v395 = vsub.f32 %v139, %v394
    %v396 = vand.u32 %v395, 4294901760
    %v397 = vsub.f32 %v395, %v396
    %v398 = vand.u32 %v397, 4294901760
    %399 = vmatpush.msra.mxu0 %v398
    %v400 = vand.u32 %v137, 4294901760
    %v401 = vsub.f32 %v137, %v400
    %v402 = vand.u32 %v401, 4294901760
    %v403 = vsub.f32 %v401, %v402
    %v404 = vand.u32 %v403, 4294901760
    %405 = vmatpush.msra.mxu0 %v404
    %v406 = vand.u32 %v150, 4294901760
    %407 = vmatmul.f32.gmra.mxu0 %v406
    %v408 = vpop.f32.mrf.mxu0
    %v409 = vadd.f32 %v370, %v408
    %v410 = vand.u32 %v153, 4294901760
    %411 = vmatmul.f32.gmra.mxu0 %v410
    %v412 = vpop.f32.mrf.mxu0
    %v413 = vadd.f32 %v378, %v412
    %414 = vdwg.mxu0
    %415 = vmatpush.msra.mxu0 0.0
    %416 = vmatpush.msra.mxu0 0.0
    %417 = vmatpush.msra.mxu0 0.0
    %418 = vmatpush.msra.mxu0 0.0
    %419 = vmatpush.msra.mxu0 0.0
    %420 = vmatpush.msra.mxu0 0.0
    %421 = vmatpush.msra.mxu0 0.0
    %422 = vmatpush.msra.mxu0 0.0
    %423 = vmatpush.msra.mxu0 0.0
    %424 = vmatpush.msra.mxu0 0.0
    %425 = vmatpush.msra.mxu0 0.0
    %426 = vmatpush.msra.mxu0 0.0
    %427 = vmatpush.msra.mxu0 0.0
    %428 = vmatpush.msra.mxu0 0.0
    %v429 = vand.u32 %v139, 4294901760
    %v430 = vsub.f32 %v139, %v429
    %431 = vmatpush.msra.mxu0 %v430
    %v432 = vand.u32 %v137, 4294901760
    %v433 = vsub.f32 %v137, %v432
    %434 = vmatpush.msra.mxu0 %v433
    %v435 = vand.u32 %v150, 4294901760
    %v436 = vsub.f32 %v150, %v435
    %437 = vmatmul.f32.gmra.mxu0 %v436
    %v438 = vpop.f32.mrf.mxu0
    %v439 = vadd.f32 %v409, %v438
    %v440 = vand.u32 %v153, 4294901760
    %v441 = vsub.f32 %v153, %v440
    %442 = vmatmul.f32.gmra.mxu0 %v441
    %v443 = vpop.f32.mrf.mxu0
    %v444 = vadd.f32 %v413, %v443
    %445 = vdwg.mxu0
    %446 = vmatpush.msra.mxu0 0.0
    %447 = vmatpush.msra.mxu0 0.0
    %448 = vmatpush.msra.mxu0 0.0
    %449 = vmatpush.msra.mxu0 0.0
    %450 = vmatpush.msra.mxu0 0.0
    %451 = vmatpush.msra.mxu0 0.0
    %452 = vmatpush.msra.mxu0 0.0
    %453 = vmatpush.msra.mxu0 0.0
    %454 = vmatpush.msra.mxu0 0.0
    %455 = vmatpush.msra.mxu0 0.0
    %456 = vmatpush.msra.mxu0 0.0
    %457 = vmatpush.msra.mxu0 0.0
    %458 = vmatpush.msra.mxu0 0.0
    %459 = vmatpush.msra.mxu0 0.0
    %v460 = vand.u32 %v139, 4294901760
    %461 = vmatpush.msra.mxu0 %v460
    %v462 = vand.u32 %v137, 4294901760
    %463 = vmatpush.msra.mxu0 %v462
    %v464 = vand.u32 %v150, 4294901760
    %v465 = vsub.f32 %v150, %v464
    %v466 = vand.u32 %v465, 4294901760
    %467 = vmatmul.f32.gmra.mxu0 %v466
    %v468 = vpop.f32.mrf.mxu0
    %v469 = vadd.f32 %v439, %v468
    %v470 = vand.u32 %v153, 4294901760
    %v471 = vsub.f32 %v153, %v470
    %v472 = vand.u32 %v471, 4294901760
    %473 = vmatmul.f32.gmra.mxu0 %v472
    %v474 = vpop.f32.mrf.mxu0
    %v475 = vadd.f32 %v444, %v474
    %476 = vdwg.mxu0
    %477 = vmatpush.msra.mxu0 0.0
    %478 = vmatpush.msra.mxu0 0.0
    %479 = vmatpush.msra.mxu0 0.0
    %480 = vmatpush.msra.mxu0 0.0
    %481 = vmatpush.msra.mxu0 0.0
    %482 = vmatpush.msra.mxu0 0.0
    %483 = vmatpush.msra.mxu0 0.0
    %484 = vmatpush.msra.mxu0 0.0
    %485 = vmatpush.msra.mxu0 0.0
    %486 = vmatpush.msra.mxu0 0.0
    %487 = vmatpush.msra.mxu0 0.0
    %488 = vmatpush.msra.mxu0 0.0
    %489 = vmatpush.msra.mxu0 0.0
    %490 = vmatpush.msra.mxu0 0.0
    %v491 = vand.u32 %v139, 4294901760
    %v492 = vsub.f32 %v139, %v491
    %v493 = vand.u32 %v492, 4294901760
    %494 = vmatpush.msra.mxu0 %v493
    %v495 = vand.u32 %v137, 4294901760
    %v496 = vsub.f32 %v137, %v495
    %v497 = vand.u32 %v496, 4294901760
    %498 = vmatpush.msra.mxu0 %v497
    %v499 = vand.u32 %v150, 4294901760
    %500 = vmatmul.f32.gmra.mxu0 %v499
    %v501 = vpop.f32.mrf.mxu0
    %v502 = vadd.f32 %v469, %v501
    %v503 = vand.u32 %v153, 4294901760
    %504 = vmatmul.f32.gmra.mxu0 %v503
    %v505 = vpop.f32.mrf.mxu0
    %v506 = vadd.f32 %v475, %v505
    %507 = vdwg.mxu0
    %508 = vmatpush.msra.mxu0 0.0
    %509 = vmatpush.msra.mxu0 0.0
    %510 = vmatpush.msra.mxu0 0.0
    %511 = vmatpush.msra.mxu0 0.0
    %512 = vmatpush.msra.mxu0 0.0
    %513 = vmatpush.msra.mxu0 0.0
    %514 = vmatpush.msra.mxu0 0.0
    %515 = vmatpush.msra.mxu0 0.0
    %516 = vmatpush.msra.mxu0 0.0
    %517 = vmatpush.msra.mxu0 0.0
    %518 = vmatpush.msra.mxu0 0.0
    %519 = vmatpush.msra.mxu0 0.0
    %520 = vmatpush.msra.mxu0 0.0
    %521 = vmatpush.msra.mxu0 0.0
    %v522 = vand.u32 %v139, 4294901760
    %523 = vmatpush.msra.mxu0 %v522
    %v524 = vand.u32 %v137, 4294901760
    %525 = vmatpush.msra.mxu0 %v524
    %v526 = vand.u32 %v150, 4294901760
    %527 = vmatmul.f32.gmra.mxu0 %v526
    %v528 = vpop.f32.mrf.mxu0
    %v529 = vadd.f32 %v502, %v528
    %v530 = vand.u32 %v153, 4294901760
    %531 = vmatmul.f32.gmra.mxu0 %v530
    %v532 = vpop.f32.mrf.mxu0
    %v533 = vadd.f32 %v506, %v532
    %534 = vdwg.mxu0
    %v535 = vmul.f32 %v339, %v339
    %v536 = vmul.f32 %v529, %v529
    %v537 = vmul.f32 %v343, %v343
    %v538 = vmul.f32 %v533, %v533
    %v540 = vsel %vm148, 1.0, 0
    %542 = vmatpush.msra.mxu0 0.0
    %543 = vmatpush.msra.mxu0 0.0
    %544 = vmatpush.msra.mxu0 0.0
    %545 = vmatpush.msra.mxu0 0.0
    %546 = vmatpush.msra.mxu0 0.0
    %547 = vmatpush.msra.mxu0 0.0
    %548 = vmatpush.msra.mxu0 0.0
    %549 = vmatpush.msra.mxu0 0.0
    %550 = vmatpush.msra.mxu0 0.0
    %551 = vmatpush.msra.mxu0 0.0
    %552 = vmatpush.msra.mxu0 0.0
    %553 = vmatpush.msra.mxu0 0.0
    %554 = vmatpush.msra.mxu0 0.0
    %555 = vmatpush.msra.mxu0 0.0
    %v556 = vand.u32 %v537, 4294901760
    %557 = vmatpush.msra.mxu0 %v556
    %v558 = vand.u32 %v535, 4294901760
    %559 = vmatpush.msra.mxu0 %v558
    %v560 = vand.u32 %v540, 4294901760
    %v561 = vsub.f32 %v540, %v560
    %v562 = vand.u32 %v561, 4294901760
    %v563 = vsub.f32 %v561, %v562
    %v564 = vand.u32 %v563, 4294901760
    %565 = vmatmul.f32.gmra.mxu0 %v564
    %v566 = vpop.f32.mrf.mxu0
    %v567 = vadd.f32 0.0, %v566
    %568 = vdwg.mxu0
    %569 = vmatpush.msra.mxu0 0.0
    %570 = vmatpush.msra.mxu0 0.0
    %571 = vmatpush.msra.mxu0 0.0
    %572 = vmatpush.msra.mxu0 0.0
    %573 = vmatpush.msra.mxu0 0.0
    %574 = vmatpush.msra.mxu0 0.0
    %575 = vmatpush.msra.mxu0 0.0
    %576 = vmatpush.msra.mxu0 0.0
    %577 = vmatpush.msra.mxu0 0.0
    %578 = vmatpush.msra.mxu0 0.0
    %579 = vmatpush.msra.mxu0 0.0
    %580 = vmatpush.msra.mxu0 0.0
    %581 = vmatpush.msra.mxu0 0.0
    %582 = vmatpush.msra.mxu0 0.0
    %v583 = vand.u32 %v537, 4294901760
    %v584 = vsub.f32 %v537, %v583
    %v585 = vand.u32 %v584, 4294901760
    %v586 = vsub.f32 %v584, %v585
    %v587 = vand.u32 %v586, 4294901760
    %588 = vmatpush.msra.mxu0 %v587
    %v589 = vand.u32 %v535, 4294901760
    %v590 = vsub.f32 %v535, %v589
    %v591 = vand.u32 %v590, 4294901760
    %v592 = vsub.f32 %v590, %v591
    %v593 = vand.u32 %v592, 4294901760
    %594 = vmatpush.msra.mxu0 %v593
    %v595 = vand.u32 %v540, 4294901760
    %596 = vmatmul.f32.gmra.mxu0 %v595
    %v597 = vpop.f32.mrf.mxu0
    %v598 = vadd.f32 %v567, %v597
    %599 = vdwg.mxu0
    %600 = vmatpush.msra.mxu0 0.0
    %601 = vmatpush.msra.mxu0 0.0
    %602 = vmatpush.msra.mxu0 0.0
    %603 = vmatpush.msra.mxu0 0.0
    %604 = vmatpush.msra.mxu0 0.0
    %605 = vmatpush.msra.mxu0 0.0
    %606 = vmatpush.msra.mxu0 0.0
    %607 = vmatpush.msra.mxu0 0.0
    %608 = vmatpush.msra.mxu0 0.0
    %609 = vmatpush.msra.mxu0 0.0
    %610 = vmatpush.msra.mxu0 0.0
    %611 = vmatpush.msra.mxu0 0.0
    %612 = vmatpush.msra.mxu0 0.0
    %613 = vmatpush.msra.mxu0 0.0
    %v614 = vand.u32 %v537, 4294901760
    %v615 = vsub.f32 %v537, %v614
    %616 = vmatpush.msra.mxu0 %v615
    %v617 = vand.u32 %v535, 4294901760
    %v618 = vsub.f32 %v535, %v617
    %619 = vmatpush.msra.mxu0 %v618
    %v620 = vand.u32 %v540, 4294901760
    %v621 = vsub.f32 %v540, %v620
    %622 = vmatmul.f32.gmra.mxu0 %v621
    %v623 = vpop.f32.mrf.mxu0
    %v624 = vadd.f32 %v598, %v623
    %625 = vdwg.mxu0
    %626 = vmatpush.msra.mxu0 0.0
    %627 = vmatpush.msra.mxu0 0.0
    %628 = vmatpush.msra.mxu0 0.0
    %629 = vmatpush.msra.mxu0 0.0
    %630 = vmatpush.msra.mxu0 0.0
    %631 = vmatpush.msra.mxu0 0.0
    %632 = vmatpush.msra.mxu0 0.0
    %633 = vmatpush.msra.mxu0 0.0
    %634 = vmatpush.msra.mxu0 0.0
    %635 = vmatpush.msra.mxu0 0.0
    %636 = vmatpush.msra.mxu0 0.0
    %637 = vmatpush.msra.mxu0 0.0
    %638 = vmatpush.msra.mxu0 0.0
    %639 = vmatpush.msra.mxu0 0.0
    %v640 = vand.u32 %v537, 4294901760
    %641 = vmatpush.msra.mxu0 %v640
    %v642 = vand.u32 %v535, 4294901760
    %643 = vmatpush.msra.mxu0 %v642
    %v644 = vand.u32 %v540, 4294901760
    %v645 = vsub.f32 %v540, %v644
    %v646 = vand.u32 %v645, 4294901760
    %647 = vmatmul.f32.gmra.mxu0 %v646
    %v648 = vpop.f32.mrf.mxu0
    %v649 = vadd.f32 %v624, %v648
    %650 = vdwg.mxu0
    %651 = vmatpush.msra.mxu0 0.0
    %652 = vmatpush.msra.mxu0 0.0
    %653 = vmatpush.msra.mxu0 0.0
    %654 = vmatpush.msra.mxu0 0.0
    %655 = vmatpush.msra.mxu0 0.0
    %656 = vmatpush.msra.mxu0 0.0
    %657 = vmatpush.msra.mxu0 0.0
    %658 = vmatpush.msra.mxu0 0.0
    %659 = vmatpush.msra.mxu0 0.0
    %660 = vmatpush.msra.mxu0 0.0
    %661 = vmatpush.msra.mxu0 0.0
    %662 = vmatpush.msra.mxu0 0.0
    %663 = vmatpush.msra.mxu0 0.0
    %664 = vmatpush.msra.mxu0 0.0
    %v665 = vand.u32 %v537, 4294901760
    %v666 = vsub.f32 %v537, %v665
    %v667 = vand.u32 %v666, 4294901760
    %668 = vmatpush.msra.mxu0 %v667
    %v669 = vand.u32 %v535, 4294901760
    %v670 = vsub.f32 %v535, %v669
    %v671 = vand.u32 %v670, 4294901760
    %672 = vmatpush.msra.mxu0 %v671
    %v673 = vand.u32 %v540, 4294901760
    %674 = vmatmul.f32.gmra.mxu0 %v673
    %v675 = vpop.f32.mrf.mxu0
    %v676 = vadd.f32 %v649, %v675
    %677 = vdwg.mxu0
    %678 = vmatpush.msra.mxu0 0.0
    %679 = vmatpush.msra.mxu0 0.0
    %680 = vmatpush.msra.mxu0 0.0
    %681 = vmatpush.msra.mxu0 0.0
    %682 = vmatpush.msra.mxu0 0.0
    %683 = vmatpush.msra.mxu0 0.0
    %684 = vmatpush.msra.mxu0 0.0
    %685 = vmatpush.msra.mxu0 0.0
    %686 = vmatpush.msra.mxu0 0.0
    %687 = vmatpush.msra.mxu0 0.0
    %688 = vmatpush.msra.mxu0 0.0
    %689 = vmatpush.msra.mxu0 0.0
    %690 = vmatpush.msra.mxu0 0.0
    %691 = vmatpush.msra.mxu0 0.0
    %v692 = vand.u32 %v537, 4294901760
    %693 = vmatpush.msra.mxu0 %v692
    %v694 = vand.u32 %v535, 4294901760
    %695 = vmatpush.msra.mxu0 %v694
    %v696 = vand.u32 %v540, 4294901760
    %697 = vmatmul.f32.gmra.mxu0 %v696
    %v698 = vpop.f32.mrf.mxu0
    %v699 = vadd.f32 %v676, %v698
    %700 = vdwg.mxu0
    %701 = vmatpush.msra.mxu0 0.0
    %702 = vmatpush.msra.mxu0 0.0
    %703 = vmatpush.msra.mxu0 0.0
    %704 = vmatpush.msra.mxu0 0.0
    %705 = vmatpush.msra.mxu0 0.0
    %706 = vmatpush.msra.mxu0 0.0
    %707 = vmatpush.msra.mxu0 0.0
    %708 = vmatpush.msra.mxu0 0.0
    %709 = vmatpush.msra.mxu0 0.0
    %710 = vmatpush.msra.mxu0 0.0
    %711 = vmatpush.msra.mxu0 0.0
    %712 = vmatpush.msra.mxu0 0.0
    %713 = vmatpush.msra.mxu0 0.0
    %714 = vmatpush.msra.mxu0 0.0
    %v715 = vand.u32 %v538, 4294901760
    %716 = vmatpush.msra.mxu0 %v715
    %v717 = vand.u32 %v536, 4294901760
    %718 = vmatpush.msra.mxu0 %v717
    %v719 = vand.u32 %v540, 4294901760
    %v720 = vsub.f32 %v540, %v719
    %v721 = vand.u32 %v720, 4294901760
    %v722 = vsub.f32 %v720, %v721
    %v723 = vand.u32 %v722, 4294901760
    %724 = vmatmul.f32.gmra.mxu0 %v723
    %v725 = vpop.f32.mrf.mxu0
    %v726 = vadd.f32 0.0, %v725
    %727 = vdwg.mxu0
    %728 = vmatpush.msra.mxu0 0.0
    %729 = vmatpush.msra.mxu0 0.0
    %730 = vmatpush.msra.mxu0 0.0
    %731 = vmatpush.msra.mxu0 0.0
    %732 = vmatpush.msra.mxu0 0.0
    %733 = vmatpush.msra.mxu0 0.0
    %734 = vmatpush.msra.mxu0 0.0
    %735 = vmatpush.msra.mxu0 0.0
    %736 = vmatpush.msra.mxu0 0.0
    %737 = vmatpush.msra.mxu0 0.0
    %738 = vmatpush.msra.mxu0 0.0
    %739 = vmatpush.msra.mxu0 0.0
    %740 = vmatpush.msra.mxu0 0.0
    %741 = vmatpush.msra.mxu0 0.0
    %v742 = vand.u32 %v538, 4294901760
    %v743 = vsub.f32 %v538, %v742
    %v744 = vand.u32 %v743, 4294901760
    %v745 = vsub.f32 %v743, %v744
    %v746 = vand.u32 %v745, 4294901760
    %747 = vmatpush.msra.mxu0 %v746
    %v748 = vand.u32 %v536, 4294901760
    %v749 = vsub.f32 %v536, %v748
    %v750 = vand.u32 %v749, 4294901760
    %v751 = vsub.f32 %v749, %v750
    %v752 = vand.u32 %v751, 4294901760
    %753 = vmatpush.msra.mxu0 %v752
    %v754 = vand.u32 %v540, 4294901760
    %755 = vmatmul.f32.gmra.mxu0 %v754
    %v756 = vpop.f32.mrf.mxu0
    %v757 = vadd.f32 %v726, %v756
    %758 = vdwg.mxu0
    %759 = vmatpush.msra.mxu0 0.0
    %760 = vmatpush.msra.mxu0 0.0
    %761 = vmatpush.msra.mxu0 0.0
    %762 = vmatpush.msra.mxu0 0.0
    %763 = vmatpush.msra.mxu0 0.0
    %764 = vmatpush.msra.mxu0 0.0
    %765 = vmatpush.msra.mxu0 0.0
    %766 = vmatpush.msra.mxu0 0.0
    %767 = vmatpush.msra.mxu0 0.0
    %768 = vmatpush.msra.mxu0 0.0
    %769 = vmatpush.msra.mxu0 0.0
    %770 = vmatpush.msra.mxu0 0.0
    %771 = vmatpush.msra.mxu0 0.0
    %772 = vmatpush.msra.mxu0 0.0
    %v773 = vand.u32 %v538, 4294901760
    %v774 = vsub.f32 %v538, %v773
    %775 = vmatpush.msra.mxu0 %v774
    %v776 = vand.u32 %v536, 4294901760
    %v777 = vsub.f32 %v536, %v776
    %778 = vmatpush.msra.mxu0 %v777
    %v779 = vand.u32 %v540, 4294901760
    %v780 = vsub.f32 %v540, %v779
    %781 = vmatmul.f32.gmra.mxu0 %v780
    %v782 = vpop.f32.mrf.mxu0
    %v783 = vadd.f32 %v757, %v782
    %784 = vdwg.mxu0
    %785 = vmatpush.msra.mxu0 0.0
    %786 = vmatpush.msra.mxu0 0.0
    %787 = vmatpush.msra.mxu0 0.0
    %788 = vmatpush.msra.mxu0 0.0
    %789 = vmatpush.msra.mxu0 0.0
    %790 = vmatpush.msra.mxu0 0.0
    %791 = vmatpush.msra.mxu0 0.0
    %792 = vmatpush.msra.mxu0 0.0
    %793 = vmatpush.msra.mxu0 0.0
    %794 = vmatpush.msra.mxu0 0.0
    %795 = vmatpush.msra.mxu0 0.0
    %796 = vmatpush.msra.mxu0 0.0
    %797 = vmatpush.msra.mxu0 0.0
    %798 = vmatpush.msra.mxu0 0.0
    %v799 = vand.u32 %v538, 4294901760
    %800 = vmatpush.msra.mxu0 %v799
    %v801 = vand.u32 %v536, 4294901760
    %802 = vmatpush.msra.mxu0 %v801
    %v803 = vand.u32 %v540, 4294901760
    %v804 = vsub.f32 %v540, %v803
    %v805 = vand.u32 %v804, 4294901760
    %806 = vmatmul.f32.gmra.mxu0 %v805
    %v807 = vpop.f32.mrf.mxu0
    %v808 = vadd.f32 %v783, %v807
    %809 = vdwg.mxu0
    %810 = vmatpush.msra.mxu0 0.0
    %811 = vmatpush.msra.mxu0 0.0
    %812 = vmatpush.msra.mxu0 0.0
    %813 = vmatpush.msra.mxu0 0.0
    %814 = vmatpush.msra.mxu0 0.0
    %815 = vmatpush.msra.mxu0 0.0
    %816 = vmatpush.msra.mxu0 0.0
    %817 = vmatpush.msra.mxu0 0.0
    %818 = vmatpush.msra.mxu0 0.0
    %819 = vmatpush.msra.mxu0 0.0
    %820 = vmatpush.msra.mxu0 0.0
    %821 = vmatpush.msra.mxu0 0.0
    %822 = vmatpush.msra.mxu0 0.0
    %823 = vmatpush.msra.mxu0 0.0
    %v824 = vand.u32 %v538, 4294901760
    %v825 = vsub.f32 %v538, %v824
    %v826 = vand.u32 %v825, 4294901760
    %827 = vmatpush.msra.mxu0 %v826
    %v828 = vand.u32 %v536, 4294901760
    %v829 = vsub.f32 %v536, %v828
    %v830 = vand.u32 %v829, 4294901760
    %831 = vmatpush.msra.mxu0 %v830
    %v832 = vand.u32 %v540, 4294901760
    %833 = vmatmul.f32.gmra.mxu0 %v832
    %v834 = vpop.f32.mrf.mxu0
    %v835 = vadd.f32 %v808, %v834
    %836 = vdwg.mxu0
    %837 = vmatpush.msra.mxu0 0.0
    %838 = vmatpush.msra.mxu0 0.0
    %839 = vmatpush.msra.mxu0 0.0
    %840 = vmatpush.msra.mxu0 0.0
    %841 = vmatpush.msra.mxu0 0.0
    %842 = vmatpush.msra.mxu0 0.0
    %843 = vmatpush.msra.mxu0 0.0
    %844 = vmatpush.msra.mxu0 0.0
    %845 = vmatpush.msra.mxu0 0.0
    %846 = vmatpush.msra.mxu0 0.0
    %847 = vmatpush.msra.mxu0 0.0
    %848 = vmatpush.msra.mxu0 0.0
    %849 = vmatpush.msra.mxu0 0.0
    %850 = vmatpush.msra.mxu0 0.0
    %v851 = vand.u32 %v538, 4294901760
    %852 = vmatpush.msra.mxu0 %v851
    %v853 = vand.u32 %v536, 4294901760
    %854 = vmatpush.msra.mxu0 %v853
    %v855 = vand.u32 %v540, 4294901760
    %856 = vmatmul.f32.gmra.mxu0 %v855
    %v857 = vpop.f32.mrf.mxu0
    %v858 = vadd.f32 %v835, %v857
    %859 = vdwg.mxu0
    %v860 = vrsqrt.pop %v699
    %v861 = vmul.f32 %v860, %v699
    %v862 = vmul.f32 %v861, %v860
    %v863 = vmul.f32 0.5, %v862
    %v864 = vsub.f32 1.5, %v863
    %v865 = vmul.f32 %v860, %v864
    %v866 = vmul.f32 %v699, %v865
    %vm867 = vcmp.eq.f32.partialorder %v699, inf
    %v868 = vsel %vm867, %v699, %v866
    %vm869 = vcmp.eq.f32.partialorder %v699, 0.0
    %v870 = vand.u32 %v699, 2147483648
    %v871 = vsel %vm869, %v870, %v868
    %v872 = vrsqrt.pop %v858
    %v873 = vmul.f32 %v872, %v858
    %v874 = vmul.f32 %v873, %v872
    %v875 = vmul.f32 0.5, %v874
    %v876 = vsub.f32 1.5, %v875
    %v877 = vmul.f32 %v872, %v876
    %v878 = vmul.f32 %v858, %v877
    %vm879 = vcmp.eq.f32.partialorder %v858, inf
    %v880 = vsel %vm879, %v858, %v878
    %vm881 = vcmp.eq.f32.partialorder %v858, 0.0
    %v882 = vand.u32 %v858, 2147483648
    %v883 = vsel %vm881, %v882, %v880
    %v884 = vmul.f32 %v871, 0.2581989
    %v885 = vmul.f32 %v883, 0.2581989
    %v886 = vadd.f32 %v884, 1e-08
    %v887 = vadd.f32 %v885, 1e-08
    %v888 = vrcp.pop %v886
    %v889 = vmul.f32 %v886, %v888
    %v890 = vsub.f32 1.0, %v889
    %v891 = vmul.f32 %v888, %v890
    %v892 = vadd.f32 %v888, %v891
    %vm893 = vweird.f32 %v886
    %vm894 = vweird.f32 %v888
    %vm895 = vmor %vm893, %vm894
    %v896 = vsel %vm895, %v888, %v892
    %v897 = vand.u32 2147483647, %v886
    %vm898 = vcmp.eq.f32.partialorder %v897, 8.507059e+37
    %v899 = vand.u32 %v886, 2147483648
    %v900 = vor.u32 1.1754944e-38, %v899
    %v901 = vsel %vm898, %v900, %v896
    %v902 = vrcp.pop %v887
    %v903 = vmul.f32 %v887, %v902
    %v904 = vsub.f32 1.0, %v903
    %v905 = vmul.f32 %v902, %v904
    %v906 = vadd.f32 %v902, %v905
    %vm907 = vweird.f32 %v887
    %vm908 = vweird.f32 %v902
    %vm909 = vmor %vm907, %vm908
    %v910 = vsel %vm909, %v902, %v906
    %v911 = vand.u32 2147483647, %v887
    %vm912 = vcmp.eq.f32.partialorder %v911, 8.507059e+37
    %v913 = vand.u32 %v887, 2147483648
    %v914 = vor.u32 1.1754944e-38, %v913
    %v915 = vsel %vm912, %v914, %v910
    %v916 = vperm.slane %v901, 0
    %v917 = vperm.slane %v915, 0
    %v918 = vmul.f32 %v339, %v916
    %v919 = vmul.f32 %v529, %v917
    %v920 = vmul.f32 %v343, %v916
    %v921 = vmul.f32 %v533, %v917
    %922 = vset.pattern.permute.xlu0 4
    %923 = vperm.xlu0 %922, %v17
    %v924 = vpop.permute.xlu0 %923
    %926 = vset.pattern.permute.xlu0 4
    %927 = vperm.xlu0 %926, %v18
    %v928 = vpop.permute.xlu0 %927
    %v930 = vmul.f32 %v924, %v918
    %v931 = vmul.f32 %v924, %v919
    %v932 = vmul.f32 %v928, %v920
    %v933 = vmul.f32 %v928, %v921
    %v934 = vmul.f32 %v930, 0.5
    %v935 = vmul.f32 %v931, 0.5
    %v936 = vmul.f32 %v932, 0.5
    %v937 = vmul.f32 %v933, 0.5
    %v938 = vtanh.pop %v934
    %v939 = vtanh.pop %v935
    %v940 = vtanh.pop %v936
    %v941 = vtanh.pop %v937
    %v942 = vadd.f32 %v938, 1.0
    %v943 = vadd.f32 %v939, 1.0
    %v944 = vadd.f32 %v940, 1.0
    %v945 = vadd.f32 %v941, 1.0
    %v946 = vmul.f32 %v934, %v942
    %v947 = vmul.f32 %v935, %v943
    %v948 = vmul.f32 %v936, %v944
    %v949 = vmul.f32 %v937, %v945
    %950 = vset.pattern.permute.xlu0 5
    %951 = vperm.xlu0 %950, %v17
    %v952 = vpop.permute.xlu0 %951
    %954 = vset.pattern.permute.xlu0 5
    %955 = vperm.xlu0 %954, %v18
    %v956 = vpop.permute.xlu0 %955
    %v959 = vsel %vm148, %v15, 0
    %v962 = vsel %vm148, %v16, 0
    %964 = vmatpush.msra.mxu0 0.0
    %965 = vmatpush.msra.mxu0 0.0
    %966 = vmatpush.msra.mxu0 0.0
    %967 = vmatpush.msra.mxu0 0.0
    %968 = vmatpush.msra.mxu0 0.0
    %969 = vmatpush.msra.mxu0 0.0
    %970 = vmatpush.msra.mxu0 0.0
    %971 = vmatpush.msra.mxu0 0.0
    %972 = vmatpush.msra.mxu0 0.0
    %973 = vmatpush.msra.mxu0 0.0
    %974 = vmatpush.msra.mxu0 0.0
    %975 = vmatpush.msra.mxu0 0.0
    %976 = vmatpush.msra.mxu0 0.0
    %977 = vmatpush.msra.mxu0 0.0
    %v978 = vand.u32 %v948, 4294901760
    %979 = vmatpush.msra.mxu0 %v978
    %v980 = vand.u32 %v946, 4294901760
    %981 = vmatpush.msra.mxu0 %v980
    %v982 = vand.u32 %v959, 4294901760
    %v983 = vsub.f32 %v959, %v982
    %v984 = vand.u32 %v983, 4294901760
    %v985 = vsub.f32 %v983, %v984
    %v986 = vand.u32 %v985, 4294901760
    %987 = vmatmul.f32.gmra.mxu0 %v986
    %v988 = vpop.f32.mrf.mxu0
    %v989 = vadd.f32 %v952, %v988
    %v990 = vand.u32 %v962, 4294901760
    %v991 = vsub.f32 %v962, %v990
    %v992 = vand.u32 %v991, 4294901760
    %v993 = vsub.f32 %v991, %v992
    %v994 = vand.u32 %v993, 4294901760
    %995 = vmatmul.f32.gmra.mxu0 %v994
    %v996 = vpop.f32.mrf.mxu0
    %v997 = vadd.f32 %v956, %v996
    %998 = vdwg.mxu0
    %999 = vmatpush.msra.mxu0 0.0
    %1000 = vmatpush.msra.mxu0 0.0
    %1001 = vmatpush.msra.mxu0 0.0
    %1002 = vmatpush.msra.mxu0 0.0
    %1003 = vmatpush.msra.mxu0 0.0
    %1004 = vmatpush.msra.mxu0 0.0
    %1005 = vmatpush.msra.mxu0 0.0
    %1006 = vmatpush.msra.mxu0 0.0
    %1007 = vmatpush.msra.mxu0 0.0
    %1008 = vmatpush.msra.mxu0 0.0
    %1009 = vmatpush.msra.mxu0 0.0
    %1010 = vmatpush.msra.mxu0 0.0
    %1011 = vmatpush.msra.mxu0 0.0
    %1012 = vmatpush.msra.mxu0 0.0
    %v1013 = vand.u32 %v948, 4294901760
    %v1014 = vsub.f32 %v948, %v1013
    %v1015 = vand.u32 %v1014, 4294901760
    %v1016 = vsub.f32 %v1014, %v1015
    %v1017 = vand.u32 %v1016, 4294901760
    %1018 = vmatpush.msra.mxu0 %v1017
    %v1019 = vand.u32 %v946, 4294901760
    %v1020 = vsub.f32 %v946, %v1019
    %v1021 = vand.u32 %v1020, 4294901760
    %v1022 = vsub.f32 %v1020, %v1021
    %v1023 = vand.u32 %v1022, 4294901760
    %1024 = vmatpush.msra.mxu0 %v1023
    %v1025 = vand.u32 %v959, 4294901760
    %1026 = vmatmul.f32.gmra.mxu0 %v1025
    %v1027 = vpop.f32.mrf.mxu0
    %v1028 = vadd.f32 %v989, %v1027
    %v1029 = vand.u32 %v962, 4294901760
    %1030 = vmatmul.f32.gmra.mxu0 %v1029
    %v1031 = vpop.f32.mrf.mxu0
    %v1032 = vadd.f32 %v997, %v1031
    %1033 = vdwg.mxu0
    %1034 = vmatpush.msra.mxu0 0.0
    %1035 = vmatpush.msra.mxu0 0.0
    %1036 = vmatpush.msra.mxu0 0.0
    %1037 = vmatpush.msra.mxu0 0.0
    %1038 = vmatpush.msra.mxu0 0.0
    %1039 = vmatpush.msra.mxu0 0.0
    %1040 = vmatpush.msra.mxu0 0.0
    %1041 = vmatpush.msra.mxu0 0.0
    %1042 = vmatpush.msra.mxu0 0.0
    %1043 = vmatpush.msra.mxu0 0.0
    %1044 = vmatpush.msra.mxu0 0.0
    %1045 = vmatpush.msra.mxu0 0.0
    %1046 = vmatpush.msra.mxu0 0.0
    %1047 = vmatpush.msra.mxu0 0.0
    %v1048 = vand.u32 %v948, 4294901760
    %v1049 = vsub.f32 %v948, %v1048
    %1050 = vmatpush.msra.mxu0 %v1049
    %v1051 = vand.u32 %v946, 4294901760
    %v1052 = vsub.f32 %v946, %v1051
    %1053 = vmatpush.msra.mxu0 %v1052
    %v1054 = vand.u32 %v959, 4294901760
    %v1055 = vsub.f32 %v959, %v1054
    %1056 = vmatmul.f32.gmra.mxu0 %v1055
    %v1057 = vpop.f32.mrf.mxu0
    %v1058 = vadd.f32 %v1028, %v1057
    %v1059 = vand.u32 %v962, 4294901760
    %v1060 = vsub.f32 %v962, %v1059
    %1061 = vmatmul.f32.gmra.mxu0 %v1060
    %v1062 = vpop.f32.mrf.mxu0
    %v1063 = vadd.f32 %v1032, %v1062
    %1064 = vdwg.mxu0
    %1065 = vmatpush.msra.mxu0 0.0
    %1066 = vmatpush.msra.mxu0 0.0
    %1067 = vmatpush.msra.mxu0 0.0
    %1068 = vmatpush.msra.mxu0 0.0
    %1069 = vmatpush.msra.mxu0 0.0
    %1070 = vmatpush.msra.mxu0 0.0
    %1071 = vmatpush.msra.mxu0 0.0
    %1072 = vmatpush.msra.mxu0 0.0
    %1073 = vmatpush.msra.mxu0 0.0
    %1074 = vmatpush.msra.mxu0 0.0
    %1075 = vmatpush.msra.mxu0 0.0
    %1076 = vmatpush.msra.mxu0 0.0
    %1077 = vmatpush.msra.mxu0 0.0
    %1078 = vmatpush.msra.mxu0 0.0
    %v1079 = vand.u32 %v948, 4294901760
    %1080 = vmatpush.msra.mxu0 %v1079
    %v1081 = vand.u32 %v946, 4294901760
    %1082 = vmatpush.msra.mxu0 %v1081
    %v1083 = vand.u32 %v959, 4294901760
    %v1084 = vsub.f32 %v959, %v1083
    %v1085 = vand.u32 %v1084, 4294901760
    %1086 = vmatmul.f32.gmra.mxu0 %v1085
    %v1087 = vpop.f32.mrf.mxu0
    %v1088 = vadd.f32 %v1058, %v1087
    %v1089 = vand.u32 %v962, 4294901760
    %v1090 = vsub.f32 %v962, %v1089
    %v1091 = vand.u32 %v1090, 4294901760
    %1092 = vmatmul.f32.gmra.mxu0 %v1091
    %v1093 = vpop.f32.mrf.mxu0
    %v1094 = vadd.f32 %v1063, %v1093
    %1095 = vdwg.mxu0
    %1096 = vmatpush.msra.mxu0 0.0
    %1097 = vmatpush.msra.mxu0 0.0
    %1098 = vmatpush.msra.mxu0 0.0
    %1099 = vmatpush.msra.mxu0 0.0
    %1100 = vmatpush.msra.mxu0 0.0
    %1101 = vmatpush.msra.mxu0 0.0
    %1102 = vmatpush.msra.mxu0 0.0
    %1103 = vmatpush.msra.mxu0 0.0
    %1104 = vmatpush.msra.mxu0 0.0
    %1105 = vmatpush.msra.mxu0 0.0
    %1106 = vmatpush.msra.mxu0 0.0
    %1107 = vmatpush.msra.mxu0 0.0
    %1108 = vmatpush.msra.mxu0 0.0
    %1109 = vmatpush.msra.mxu0 0.0
    %v1110 = vand.u32 %v948, 4294901760
    %v1111 = vsub.f32 %v948, %v1110
    %v1112 = vand.u32 %v1111, 4294901760
    %1113 = vmatpush.msra.mxu0 %v1112
    %v1114 = vand.u32 %v946, 4294901760
    %v1115 = vsub.f32 %v946, %v1114
    %v1116 = vand.u32 %v1115, 4294901760
    %1117 = vmatpush.msra.mxu0 %v1116
    %v1118 = vand.u32 %v959, 4294901760
    %1119 = vmatmul.f32.gmra.mxu0 %v1118
    %v1120 = vpop.f32.mrf.mxu0
    %v1121 = vadd.f32 %v1088, %v1120
    %v1122 = vand.u32 %v962, 4294901760
    %1123 = vmatmul.f32.gmra.mxu0 %v1122
    %v1124 = vpop.f32.mrf.mxu0
    %v1125 = vadd.f32 %v1094, %v1124
    %1126 = vdwg.mxu0
    %1127 = vmatpush.msra.mxu0 0.0
    %1128 = vmatpush.msra.mxu0 0.0
    %1129 = vmatpush.msra.mxu0 0.0
    %1130 = vmatpush.msra.mxu0 0.0
    %1131 = vmatpush.msra.mxu0 0.0
    %1132 = vmatpush.msra.mxu0 0.0
    %1133 = vmatpush.msra.mxu0 0.0
    %1134 = vmatpush.msra.mxu0 0.0
    %1135 = vmatpush.msra.mxu0 0.0
    %1136 = vmatpush.msra.mxu0 0.0
    %1137 = vmatpush.msra.mxu0 0.0
    %1138 = vmatpush.msra.mxu0 0.0
    %1139 = vmatpush.msra.mxu0 0.0
    %1140 = vmatpush.msra.mxu0 0.0
    %v1141 = vand.u32 %v948, 4294901760
    %1142 = vmatpush.msra.mxu0 %v1141
    %v1143 = vand.u32 %v946, 4294901760
    %1144 = vmatpush.msra.mxu0 %v1143
    %v1145 = vand.u32 %v959, 4294901760
    %1146 = vmatmul.f32.gmra.mxu0 %v1145
    %v1147 = vpop.f32.mrf.mxu0
    %v1148 = vadd.f32 %v1121, %v1147
    %v1149 = vand.u32 %v962, 4294901760
    %1150 = vmatmul.f32.gmra.mxu0 %v1149
    %v1151 = vpop.f32.mrf.mxu0
    %v1152 = vadd.f32 %v1125, %v1151
    %1153 = vdwg.mxu0
    %1154 = vmatpush.msra.mxu0 0.0
    %1155 = vmatpush.msra.mxu0 0.0
    %1156 = vmatpush.msra.mxu0 0.0
    %1157 = vmatpush.msra.mxu0 0.0
    %1158 = vmatpush.msra.mxu0 0.0
    %1159 = vmatpush.msra.mxu0 0.0
    %1160 = vmatpush.msra.mxu0 0.0
    %1161 = vmatpush.msra.mxu0 0.0
    %1162 = vmatpush.msra.mxu0 0.0
    %1163 = vmatpush.msra.mxu0 0.0
    %1164 = vmatpush.msra.mxu0 0.0
    %1165 = vmatpush.msra.mxu0 0.0
    %1166 = vmatpush.msra.mxu0 0.0
    %1167 = vmatpush.msra.mxu0 0.0
    %v1168 = vand.u32 %v949, 4294901760
    %1169 = vmatpush.msra.mxu0 %v1168
    %v1170 = vand.u32 %v947, 4294901760
    %1171 = vmatpush.msra.mxu0 %v1170
    %v1172 = vand.u32 %v959, 4294901760
    %v1173 = vsub.f32 %v959, %v1172
    %v1174 = vand.u32 %v1173, 4294901760
    %v1175 = vsub.f32 %v1173, %v1174
    %v1176 = vand.u32 %v1175, 4294901760
    %1177 = vmatmul.f32.gmra.mxu0 %v1176
    %v1178 = vpop.f32.mrf.mxu0
    %v1179 = vadd.f32 %v952, %v1178
    %v1180 = vand.u32 %v962, 4294901760
    %v1181 = vsub.f32 %v962, %v1180
    %v1182 = vand.u32 %v1181, 4294901760
    %v1183 = vsub.f32 %v1181, %v1182
    %v1184 = vand.u32 %v1183, 4294901760
    %1185 = vmatmul.f32.gmra.mxu0 %v1184
    %v1186 = vpop.f32.mrf.mxu0
    %v1187 = vadd.f32 %v956, %v1186
    %1188 = vdwg.mxu0
    %1189 = vmatpush.msra.mxu0 0.0
    %1190 = vmatpush.msra.mxu0 0.0
    %1191 = vmatpush.msra.mxu0 0.0
    %1192 = vmatpush.msra.mxu0 0.0
    %1193 = vmatpush.msra.mxu0 0.0
    %1194 = vmatpush.msra.mxu0 0.0
    %1195 = vmatpush.msra.mxu0 0.0
    %1196 = vmatpush.msra.mxu0 0.0
    %1197 = vmatpush.msra.mxu0 0.0
    %1198 = vmatpush.msra.mxu0 0.0
    %1199 = vmatpush.msra.mxu0 0.0
    %1200 = vmatpush.msra.mxu0 0.0
    %1201 = vmatpush.msra.mxu0 0.0
    %1202 = vmatpush.msra.mxu0 0.0
    %v1203 = vand.u32 %v949, 4294901760
    %v1204 = vsub.f32 %v949, %v1203
    %v1205 = vand.u32 %v1204, 4294901760
    %v1206 = vsub.f32 %v1204, %v1205
    %v1207 = vand.u32 %v1206, 4294901760
    %1208 = vmatpush.msra.mxu0 %v1207
    %v1209 = vand.u32 %v947, 4294901760
    %v1210 = vsub.f32 %v947, %v1209
    %v1211 = vand.u32 %v1210, 4294901760
    %v1212 = vsub.f32 %v1210, %v1211
    %v1213 = vand.u32 %v1212, 4294901760
    %1214 = vmatpush.msra.mxu0 %v1213
    %v1215 = vand.u32 %v959, 4294901760
    %1216 = vmatmul.f32.gmra.mxu0 %v1215
    %v1217 = vpop.f32.mrf.mxu0
    %v1218 = vadd.f32 %v1179, %v1217
    %v1219 = vand.u32 %v962, 4294901760
    %1220 = vmatmul.f32.gmra.mxu0 %v1219
    %v1221 = vpop.f32.mrf.mxu0
    %v1222 = vadd.f32 %v1187, %v1221
    %1223 = vdwg.mxu0
    %1224 = vmatpush.msra.mxu0 0.0
    %1225 = vmatpush.msra.mxu0 0.0
    %1226 = vmatpush.msra.mxu0 0.0
    %1227 = vmatpush.msra.mxu0 0.0
    %1228 = vmatpush.msra.mxu0 0.0
    %1229 = vmatpush.msra.mxu0 0.0
    %1230 = vmatpush.msra.mxu0 0.0
    %1231 = vmatpush.msra.mxu0 0.0
    %1232 = vmatpush.msra.mxu0 0.0
    %1233 = vmatpush.msra.mxu0 0.0
    %1234 = vmatpush.msra.mxu0 0.0
    %1235 = vmatpush.msra.mxu0 0.0
    %1236 = vmatpush.msra.mxu0 0.0
    %1237 = vmatpush.msra.mxu0 0.0
    %v1238 = vand.u32 %v949, 4294901760
    %v1239 = vsub.f32 %v949, %v1238
    %1240 = vmatpush.msra.mxu0 %v1239
    %v1241 = vand.u32 %v947, 4294901760
    %v1242 = vsub.f32 %v947, %v1241
    %1243 = vmatpush.msra.mxu0 %v1242
    %v1244 = vand.u32 %v959, 4294901760
    %v1245 = vsub.f32 %v959, %v1244
    %1246 = vmatmul.f32.gmra.mxu0 %v1245
    %v1247 = vpop.f32.mrf.mxu0
    %v1248 = vadd.f32 %v1218, %v1247
    %v1249 = vand.u32 %v962, 4294901760
    %v1250 = vsub.f32 %v962, %v1249
    %1251 = vmatmul.f32.gmra.mxu0 %v1250
    %v1252 = vpop.f32.mrf.mxu0
    %v1253 = vadd.f32 %v1222, %v1252
    %1254 = vdwg.mxu0
    %1255 = vmatpush.msra.mxu0 0.0
    %1256 = vmatpush.msra.mxu0 0.0
    %1257 = vmatpush.msra.mxu0 0.0
    %1258 = vmatpush.msra.mxu0 0.0
    %1259 = vmatpush.msra.mxu0 0.0
    %1260 = vmatpush.msra.mxu0 0.0
    %1261 = vmatpush.msra.mxu0 0.0
    %1262 = vmatpush.msra.mxu0 0.0
    %1263 = vmatpush.msra.mxu0 0.0
    %1264 = vmatpush.msra.mxu0 0.0
    %1265 = vmatpush.msra.mxu0 0.0
    %1266 = vmatpush.msra.mxu0 0.0
    %1267 = vmatpush.msra.mxu0 0.0
    %1268 = vmatpush.msra.mxu0 0.0
    %v1269 = vand.u32 %v949, 4294901760
    %1270 = vmatpush.msra.mxu0 %v1269
    %v1271 = vand.u32 %v947, 4294901760
    %1272 = vmatpush.msra.mxu0 %v1271
    %v1273 = vand.u32 %v959, 4294901760
    %v1274 = vsub.f32 %v959, %v1273
    %v1275 = vand.u32 %v1274, 4294901760
    %1276 = vmatmul.f32.gmra.mxu0 %v1275
    %v1277 = vpop.f32.mrf.mxu0
    %v1278 = vadd.f32 %v1248, %v1277
    %v1279 = vand.u32 %v962, 4294901760
    %v1280 = vsub.f32 %v962, %v1279
    %v1281 = vand.u32 %v1280, 4294901760
    %1282 = vmatmul.f32.gmra.mxu0 %v1281
    %v1283 = vpop.f32.mrf.mxu0
    %v1284 = vadd.f32 %v1253, %v1283
    %1285 = vdwg.mxu0
    %1286 = vmatpush.msra.mxu0 0.0
    %1287 = vmatpush.msra.mxu0 0.0
    %1288 = vmatpush.msra.mxu0 0.0
    %1289 = vmatpush.msra.mxu0 0.0
    %1290 = vmatpush.msra.mxu0 0.0
    %1291 = vmatpush.msra.mxu0 0.0
    %1292 = vmatpush.msra.mxu0 0.0
    %1293 = vmatpush.msra.mxu0 0.0
    %1294 = vmatpush.msra.mxu0 0.0
    %1295 = vmatpush.msra.mxu0 0.0
    %1296 = vmatpush.msra.mxu0 0.0
    %1297 = vmatpush.msra.mxu0 0.0
    %1298 = vmatpush.msra.mxu0 0.0
    %1299 = vmatpush.msra.mxu0 0.0
    %v1300 = vand.u32 %v949, 4294901760
    %v1301 = vsub.f32 %v949, %v1300
    %v1302 = vand.u32 %v1301, 4294901760
    %1303 = vmatpush.msra.mxu0 %v1302
    %v1304 = vand.u32 %v947, 4294901760
    %v1305 = vsub.f32 %v947, %v1304
    %v1306 = vand.u32 %v1305, 4294901760
    %1307 = vmatpush.msra.mxu0 %v1306
    %v1308 = vand.u32 %v959, 4294901760
    %1309 = vmatmul.f32.gmra.mxu0 %v1308
    %v1310 = vpop.f32.mrf.mxu0
    %v1311 = vadd.f32 %v1278, %v1310
    %v1312 = vand.u32 %v962, 4294901760
    %1313 = vmatmul.f32.gmra.mxu0 %v1312
    %v1314 = vpop.f32.mrf.mxu0
    %v1315 = vadd.f32 %v1284, %v1314
    %1316 = vdwg.mxu0
    %1317 = vmatpush.msra.mxu0 0.0
    %1318 = vmatpush.msra.mxu0 0.0
    %1319 = vmatpush.msra.mxu0 0.0
    %1320 = vmatpush.msra.mxu0 0.0
    %1321 = vmatpush.msra.mxu0 0.0
    %1322 = vmatpush.msra.mxu0 0.0
    %1323 = vmatpush.msra.mxu0 0.0
    %1324 = vmatpush.msra.mxu0 0.0
    %1325 = vmatpush.msra.mxu0 0.0
    %1326 = vmatpush.msra.mxu0 0.0
    %1327 = vmatpush.msra.mxu0 0.0
    %1328 = vmatpush.msra.mxu0 0.0
    %1329 = vmatpush.msra.mxu0 0.0
    %1330 = vmatpush.msra.mxu0 0.0
    %v1331 = vand.u32 %v949, 4294901760
    %1332 = vmatpush.msra.mxu0 %v1331
    %v1333 = vand.u32 %v947, 4294901760
    %1334 = vmatpush.msra.mxu0 %v1333
    %v1335 = vand.u32 %v959, 4294901760
    %1336 = vmatmul.f32.gmra.mxu0 %v1335
    %v1337 = vpop.f32.mrf.mxu0
    %v1338 = vadd.f32 %v1311, %v1337
    %v1339 = vand.u32 %v962, 4294901760
    %1340 = vmatmul.f32.gmra.mxu0 %v1339
    %v1341 = vpop.f32.mrf.mxu0
    %v1342 = vadd.f32 %v1315, %v1341
    %1343 = vdwg.mxu0
    %v1344 = vmul.f32 %v1148, %v1148
    %v1345 = vmul.f32 %v1338, %v1338
    %v1346 = vmul.f32 %v1152, %v1152
    %v1347 = vmul.f32 %v1342, %v1342
    %1348 = vmatpush.msra.mxu0 0.0
    %1349 = vmatpush.msra.mxu0 0.0
    %1350 = vmatpush.msra.mxu0 0.0
    %1351 = vmatpush.msra.mxu0 0.0
    %1352 = vmatpush.msra.mxu0 0.0
    %1353 = vmatpush.msra.mxu0 0.0
    %1354 = vmatpush.msra.mxu0 0.0
    %1355 = vmatpush.msra.mxu0 0.0
    %1356 = vmatpush.msra.mxu0 0.0
    %1357 = vmatpush.msra.mxu0 0.0
    %1358 = vmatpush.msra.mxu0 0.0
    %1359 = vmatpush.msra.mxu0 0.0
    %1360 = vmatpush.msra.mxu0 0.0
    %1361 = vmatpush.msra.mxu0 0.0
    %v1362 = vand.u32 %v1346, 4294901760
    %1363 = vmatpush.msra.mxu0 %v1362
    %v1364 = vand.u32 %v1344, 4294901760
    %1365 = vmatpush.msra.mxu0 %v1364
    %v1366 = vand.u32 %v540, 4294901760
    %v1367 = vsub.f32 %v540, %v1366
    %v1368 = vand.u32 %v1367, 4294901760
    %v1369 = vsub.f32 %v1367, %v1368
    %v1370 = vand.u32 %v1369, 4294901760
    %1371 = vmatmul.f32.gmra.mxu0 %v1370
    %v1372 = vpop.f32.mrf.mxu0
    %v1373 = vadd.f32 0.0, %v1372
    %1374 = vdwg.mxu0
    %1375 = vmatpush.msra.mxu0 0.0
    %1376 = vmatpush.msra.mxu0 0.0
    %1377 = vmatpush.msra.mxu0 0.0
    %1378 = vmatpush.msra.mxu0 0.0
    %1379 = vmatpush.msra.mxu0 0.0
    %1380 = vmatpush.msra.mxu0 0.0
    %1381 = vmatpush.msra.mxu0 0.0
    %1382 = vmatpush.msra.mxu0 0.0
    %1383 = vmatpush.msra.mxu0 0.0
    %1384 = vmatpush.msra.mxu0 0.0
    %1385 = vmatpush.msra.mxu0 0.0
    %1386 = vmatpush.msra.mxu0 0.0
    %1387 = vmatpush.msra.mxu0 0.0
    %1388 = vmatpush.msra.mxu0 0.0
    %v1389 = vand.u32 %v1346, 4294901760
    %v1390 = vsub.f32 %v1346, %v1389
    %v1391 = vand.u32 %v1390, 4294901760
    %v1392 = vsub.f32 %v1390, %v1391
    %v1393 = vand.u32 %v1392, 4294901760
    %1394 = vmatpush.msra.mxu0 %v1393
    %v1395 = vand.u32 %v1344, 4294901760
    %v1396 = vsub.f32 %v1344, %v1395
    %v1397 = vand.u32 %v1396, 4294901760
    %v1398 = vsub.f32 %v1396, %v1397
    %v1399 = vand.u32 %v1398, 4294901760
    %1400 = vmatpush.msra.mxu0 %v1399
    %v1401 = vand.u32 %v540, 4294901760
    %1402 = vmatmul.f32.gmra.mxu0 %v1401
    %v1403 = vpop.f32.mrf.mxu0
    %v1404 = vadd.f32 %v1373, %v1403
    %1405 = vdwg.mxu0
    %1406 = vmatpush.msra.mxu0 0.0
    %1407 = vmatpush.msra.mxu0 0.0
    %1408 = vmatpush.msra.mxu0 0.0
    %1409 = vmatpush.msra.mxu0 0.0
    %1410 = vmatpush.msra.mxu0 0.0
    %1411 = vmatpush.msra.mxu0 0.0
    %1412 = vmatpush.msra.mxu0 0.0
    %1413 = vmatpush.msra.mxu0 0.0
    %1414 = vmatpush.msra.mxu0 0.0
    %1415 = vmatpush.msra.mxu0 0.0
    %1416 = vmatpush.msra.mxu0 0.0
    %1417 = vmatpush.msra.mxu0 0.0
    %1418 = vmatpush.msra.mxu0 0.0
    %1419 = vmatpush.msra.mxu0 0.0
    %v1420 = vand.u32 %v1346, 4294901760
    %v1421 = vsub.f32 %v1346, %v1420
    %1422 = vmatpush.msra.mxu0 %v1421
    %v1423 = vand.u32 %v1344, 4294901760
    %v1424 = vsub.f32 %v1344, %v1423
    %1425 = vmatpush.msra.mxu0 %v1424
    %v1426 = vand.u32 %v540, 4294901760
    %v1427 = vsub.f32 %v540, %v1426
    %1428 = vmatmul.f32.gmra.mxu0 %v1427
    %v1429 = vpop.f32.mrf.mxu0
    %v1430 = vadd.f32 %v1404, %v1429
    %1431 = vdwg.mxu0
    %1432 = vmatpush.msra.mxu0 0.0
    %1433 = vmatpush.msra.mxu0 0.0
    %1434 = vmatpush.msra.mxu0 0.0
    %1435 = vmatpush.msra.mxu0 0.0
    %1436 = vmatpush.msra.mxu0 0.0
    %1437 = vmatpush.msra.mxu0 0.0
    %1438 = vmatpush.msra.mxu0 0.0
    %1439 = vmatpush.msra.mxu0 0.0
    %1440 = vmatpush.msra.mxu0 0.0
    %1441 = vmatpush.msra.mxu0 0.0
    %1442 = vmatpush.msra.mxu0 0.0
    %1443 = vmatpush.msra.mxu0 0.0
    %1444 = vmatpush.msra.mxu0 0.0
    %1445 = vmatpush.msra.mxu0 0.0
    %v1446 = vand.u32 %v1346, 4294901760
    %1447 = vmatpush.msra.mxu0 %v1446
    %v1448 = vand.u32 %v1344, 4294901760
    %1449 = vmatpush.msra.mxu0 %v1448
    %v1450 = vand.u32 %v540, 4294901760
    %v1451 = vsub.f32 %v540, %v1450
    %v1452 = vand.u32 %v1451, 4294901760
    %1453 = vmatmul.f32.gmra.mxu0 %v1452
    %v1454 = vpop.f32.mrf.mxu0
    %v1455 = vadd.f32 %v1430, %v1454
    %1456 = vdwg.mxu0
    %1457 = vmatpush.msra.mxu0 0.0
    %1458 = vmatpush.msra.mxu0 0.0
    %1459 = vmatpush.msra.mxu0 0.0
    %1460 = vmatpush.msra.mxu0 0.0
    %1461 = vmatpush.msra.mxu0 0.0
    %1462 = vmatpush.msra.mxu0 0.0
    %1463 = vmatpush.msra.mxu0 0.0
    %1464 = vmatpush.msra.mxu0 0.0
    %1465 = vmatpush.msra.mxu0 0.0
    %1466 = vmatpush.msra.mxu0 0.0
    %1467 = vmatpush.msra.mxu0 0.0
    %1468 = vmatpush.msra.mxu0 0.0
    %1469 = vmatpush.msra.mxu0 0.0
    %1470 = vmatpush.msra.mxu0 0.0
    %v1471 = vand.u32 %v1346, 4294901760
    %v1472 = vsub.f32 %v1346, %v1471
    %v1473 = vand.u32 %v1472, 4294901760
    %1474 = vmatpush.msra.mxu0 %v1473
    %v1475 = vand.u32 %v1344, 4294901760
    %v1476 = vsub.f32 %v1344, %v1475
    %v1477 = vand.u32 %v1476, 4294901760
    %1478 = vmatpush.msra.mxu0 %v1477
    %v1479 = vand.u32 %v540, 4294901760
    %1480 = vmatmul.f32.gmra.mxu0 %v1479
    %v1481 = vpop.f32.mrf.mxu0
    %v1482 = vadd.f32 %v1455, %v1481
    %1483 = vdwg.mxu0
    %1484 = vmatpush.msra.mxu0 0.0
    %1485 = vmatpush.msra.mxu0 0.0
    %1486 = vmatpush.msra.mxu0 0.0
    %1487 = vmatpush.msra.mxu0 0.0
    %1488 = vmatpush.msra.mxu0 0.0
    %1489 = vmatpush.msra.mxu0 0.0
    %1490 = vmatpush.msra.mxu0 0.0
    %1491 = vmatpush.msra.mxu0 0.0
    %1492 = vmatpush.msra.mxu0 0.0
    %1493 = vmatpush.msra.mxu0 0.0
    %1494 = vmatpush.msra.mxu0 0.0
    %1495 = vmatpush.msra.mxu0 0.0
    %1496 = vmatpush.msra.mxu0 0.0
    %1497 = vmatpush.msra.mxu0 0.0
    %v1498 = vand.u32 %v1346, 4294901760
    %1499 = vmatpush.msra.mxu0 %v1498
    %v1500 = vand.u32 %v1344, 4294901760
    %1501 = vmatpush.msra.mxu0 %v1500
    %v1502 = vand.u32 %v540, 4294901760
    %1503 = vmatmul.f32.gmra.mxu0 %v1502
    %v1504 = vpop.f32.mrf.mxu0
    %v1505 = vadd.f32 %v1482, %v1504
    %1506 = vdwg.mxu0
    %1507 = vmatpush.msra.mxu0 0.0
    %1508 = vmatpush.msra.mxu0 0.0
    %1509 = vmatpush.msra.mxu0 0.0
    %1510 = vmatpush.msra.mxu0 0.0
    %1511 = vmatpush.msra.mxu0 0.0
    %1512 = vmatpush.msra.mxu0 0.0
    %1513 = vmatpush.msra.mxu0 0.0
    %1514 = vmatpush.msra.mxu0 0.0
    %1515 = vmatpush.msra.mxu0 0.0
    %1516 = vmatpush.msra.mxu0 0.0
    %1517 = vmatpush.msra.mxu0 0.0
    %1518 = vmatpush.msra.mxu0 0.0
    %1519 = vmatpush.msra.mxu0 0.0
    %1520 = vmatpush.msra.mxu0 0.0
    %v1521 = vand.u32 %v1347, 4294901760
    %1522 = vmatpush.msra.mxu0 %v1521
    %v1523 = vand.u32 %v1345, 4294901760
    %1524 = vmatpush.msra.mxu0 %v1523
    %v1525 = vand.u32 %v540, 4294901760
    %v1526 = vsub.f32 %v540, %v1525
    %v1527 = vand.u32 %v1526, 4294901760
    %v1528 = vsub.f32 %v1526, %v1527
    %v1529 = vand.u32 %v1528, 4294901760
    %1530 = vmatmul.f32.gmra.mxu0 %v1529
    %v1531 = vpop.f32.mrf.mxu0
    %v1532 = vadd.f32 0.0, %v1531
    %1533 = vdwg.mxu0
    %1534 = vmatpush.msra.mxu0 0.0
    %1535 = vmatpush.msra.mxu0 0.0
    %1536 = vmatpush.msra.mxu0 0.0
    %1537 = vmatpush.msra.mxu0 0.0
    %1538 = vmatpush.msra.mxu0 0.0
    %1539 = vmatpush.msra.mxu0 0.0
    %1540 = vmatpush.msra.mxu0 0.0
    %1541 = vmatpush.msra.mxu0 0.0
    %1542 = vmatpush.msra.mxu0 0.0
    %1543 = vmatpush.msra.mxu0 0.0
    %1544 = vmatpush.msra.mxu0 0.0
    %1545 = vmatpush.msra.mxu0 0.0
    %1546 = vmatpush.msra.mxu0 0.0
    %1547 = vmatpush.msra.mxu0 0.0
    %v1548 = vand.u32 %v1347, 4294901760
    %v1549 = vsub.f32 %v1347, %v1548
    %v1550 = vand.u32 %v1549, 4294901760
    %v1551 = vsub.f32 %v1549, %v1550
    %v1552 = vand.u32 %v1551, 4294901760
    %1553 = vmatpush.msra.mxu0 %v1552
    %v1554 = vand.u32 %v1345, 4294901760
    %v1555 = vsub.f32 %v1345, %v1554
    %v1556 = vand.u32 %v1555, 4294901760
    %v1557 = vsub.f32 %v1555, %v1556
    %v1558 = vand.u32 %v1557, 4294901760
    %1559 = vmatpush.msra.mxu0 %v1558
    %v1560 = vand.u32 %v540, 4294901760
    %1561 = vmatmul.f32.gmra.mxu0 %v1560
    %v1562 = vpop.f32.mrf.mxu0
    %v1563 = vadd.f32 %v1532, %v1562
    %1564 = vdwg.mxu0
    %1565 = vmatpush.msra.mxu0 0.0
    %1566 = vmatpush.msra.mxu0 0.0
    %1567 = vmatpush.msra.mxu0 0.0
    %1568 = vmatpush.msra.mxu0 0.0
    %1569 = vmatpush.msra.mxu0 0.0
    %1570 = vmatpush.msra.mxu0 0.0
    %1571 = vmatpush.msra.mxu0 0.0
    %1572 = vmatpush.msra.mxu0 0.0
    %1573 = vmatpush.msra.mxu0 0.0
    %1574 = vmatpush.msra.mxu0 0.0
    %1575 = vmatpush.msra.mxu0 0.0
    %1576 = vmatpush.msra.mxu0 0.0
    %1577 = vmatpush.msra.mxu0 0.0
    %1578 = vmatpush.msra.mxu0 0.0
    %v1579 = vand.u32 %v1347, 4294901760
    %v1580 = vsub.f32 %v1347, %v1579
    %1581 = vmatpush.msra.mxu0 %v1580
    %v1582 = vand.u32 %v1345, 4294901760
    %v1583 = vsub.f32 %v1345, %v1582
    %1584 = vmatpush.msra.mxu0 %v1583
    %v1585 = vand.u32 %v540, 4294901760
    %v1586 = vsub.f32 %v540, %v1585
    %1587 = vmatmul.f32.gmra.mxu0 %v1586
    %v1588 = vpop.f32.mrf.mxu0
    %v1589 = vadd.f32 %v1563, %v1588
    %1590 = vdwg.mxu0
    %1591 = vmatpush.msra.mxu0 0.0
    %1592 = vmatpush.msra.mxu0 0.0
    %1593 = vmatpush.msra.mxu0 0.0
    %1594 = vmatpush.msra.mxu0 0.0
    %1595 = vmatpush.msra.mxu0 0.0
    %1596 = vmatpush.msra.mxu0 0.0
    %1597 = vmatpush.msra.mxu0 0.0
    %1598 = vmatpush.msra.mxu0 0.0
    %1599 = vmatpush.msra.mxu0 0.0
    %1600 = vmatpush.msra.mxu0 0.0
    %1601 = vmatpush.msra.mxu0 0.0
    %1602 = vmatpush.msra.mxu0 0.0
    %1603 = vmatpush.msra.mxu0 0.0
    %1604 = vmatpush.msra.mxu0 0.0
    %v1605 = vand.u32 %v1347, 4294901760
    %1606 = vmatpush.msra.mxu0 %v1605
    %v1607 = vand.u32 %v1345, 4294901760
    %1608 = vmatpush.msra.mxu0 %v1607
    %v1609 = vand.u32 %v540, 4294901760
    %v1610 = vsub.f32 %v540, %v1609
    %v1611 = vand.u32 %v1610, 4294901760
    %1612 = vmatmul.f32.gmra.mxu0 %v1611
    %v1613 = vpop.f32.mrf.mxu0
    %v1614 = vadd.f32 %v1589, %v1613
    %1615 = vdwg.mxu0
    %1616 = vmatpush.msra.mxu0 0.0
    %1617 = vmatpush.msra.mxu0 0.0
    %1618 = vmatpush.msra.mxu0 0.0
    %1619 = vmatpush.msra.mxu0 0.0
    %1620 = vmatpush.msra.mxu0 0.0
    %1621 = vmatpush.msra.mxu0 0.0
    %1622 = vmatpush.msra.mxu0 0.0
    %1623 = vmatpush.msra.mxu0 0.0
    %1624 = vmatpush.msra.mxu0 0.0
    %1625 = vmatpush.msra.mxu0 0.0
    %1626 = vmatpush.msra.mxu0 0.0
    %1627 = vmatpush.msra.mxu0 0.0
    %1628 = vmatpush.msra.mxu0 0.0
    %1629 = vmatpush.msra.mxu0 0.0
    %v1630 = vand.u32 %v1347, 4294901760
    %v1631 = vsub.f32 %v1347, %v1630
    %v1632 = vand.u32 %v1631, 4294901760
    %1633 = vmatpush.msra.mxu0 %v1632
    %v1634 = vand.u32 %v1345, 4294901760
    %v1635 = vsub.f32 %v1345, %v1634
    %v1636 = vand.u32 %v1635, 4294901760
    %1637 = vmatpush.msra.mxu0 %v1636
    %v1638 = vand.u32 %v540, 4294901760
    %1639 = vmatmul.f32.gmra.mxu0 %v1638
    %v1640 = vpop.f32.mrf.mxu0
    %v1641 = vadd.f32 %v1614, %v1640
    %1642 = vdwg.mxu0
    %1643 = vmatpush.msra.mxu0 0.0
    %1644 = vmatpush.msra.mxu0 0.0
    %1645 = vmatpush.msra.mxu0 0.0
    %1646 = vmatpush.msra.mxu0 0.0
    %1647 = vmatpush.msra.mxu0 0.0
    %1648 = vmatpush.msra.mxu0 0.0
    %1649 = vmatpush.msra.mxu0 0.0
    %1650 = vmatpush.msra.mxu0 0.0
    %1651 = vmatpush.msra.mxu0 0.0
    %1652 = vmatpush.msra.mxu0 0.0
    %1653 = vmatpush.msra.mxu0 0.0
    %1654 = vmatpush.msra.mxu0 0.0
    %1655 = vmatpush.msra.mxu0 0.0
    %1656 = vmatpush.msra.mxu0 0.0
    %v1657 = vand.u32 %v1347, 4294901760
    %1658 = vmatpush.msra.mxu0 %v1657
    %v1659 = vand.u32 %v1345, 4294901760
    %1660 = vmatpush.msra.mxu0 %v1659
    %v1661 = vand.u32 %v540, 4294901760
    %1662 = vmatmul.f32.gmra.mxu0 %v1661
    %v1663 = vpop.f32.mrf.mxu0
    %v1664 = vadd.f32 %v1641, %v1663
    %1665 = vdwg.mxu0
    %v1666 = vrsqrt.pop %v1505
    %v1667 = vmul.f32 %v1666, %v1505
    %v1668 = vmul.f32 %v1667, %v1666
    %v1669 = vmul.f32 0.5, %v1668
    %v1670 = vsub.f32 1.5, %v1669
    %v1671 = vmul.f32 %v1666, %v1670
    %v1672 = vmul.f32 %v1505, %v1671
    %vm1673 = vcmp.eq.f32.partialorder %v1505, inf
    %v1674 = vsel %vm1673, %v1505, %v1672
    %vm1675 = vcmp.eq.f32.partialorder %v1505, 0.0
    %v1676 = vand.u32 %v1505, 2147483648
    %v1677 = vsel %vm1675, %v1676, %v1674
    %v1678 = vrsqrt.pop %v1664
    %v1679 = vmul.f32 %v1678, %v1664
    %v1680 = vmul.f32 %v1679, %v1678
    %v1681 = vmul.f32 0.5, %v1680
    %v1682 = vsub.f32 1.5, %v1681
    %v1683 = vmul.f32 %v1678, %v1682
    %v1684 = vmul.f32 %v1664, %v1683
    %vm1685 = vcmp.eq.f32.partialorder %v1664, inf
    %v1686 = vsel %vm1685, %v1664, %v1684
    %vm1687 = vcmp.eq.f32.partialorder %v1664, 0.0
    %v1688 = vand.u32 %v1664, 2147483648
    %v1689 = vsel %vm1687, %v1688, %v1686
    %v1690 = vmul.f32 %v1677, 0.2581989
    %v1691 = vmul.f32 %v1689, 0.2581989
    %v1692 = vadd.f32 %v1690, 1e-08
    %v1693 = vadd.f32 %v1691, 1e-08
    %v1694 = vrcp.pop %v1692
    %v1695 = vmul.f32 %v1692, %v1694
    %v1696 = vsub.f32 1.0, %v1695
    %v1697 = vmul.f32 %v1694, %v1696
    %v1698 = vadd.f32 %v1694, %v1697
    %vm1699 = vweird.f32 %v1692
    %vm1700 = vweird.f32 %v1694
    %vm1701 = vmor %vm1699, %vm1700
    %v1702 = vsel %vm1701, %v1694, %v1698
    %v1703 = vand.u32 2147483647, %v1692
    %vm1704 = vcmp.eq.f32.partialorder %v1703, 8.507059e+37
    %v1705 = vand.u32 %v1692, 2147483648
    %v1706 = vor.u32 1.1754944e-38, %v1705
    %v1707 = vsel %vm1704, %v1706, %v1702
    %v1708 = vrcp.pop %v1693
    %v1709 = vmul.f32 %v1693, %v1708
    %v1710 = vsub.f32 1.0, %v1709
    %v1711 = vmul.f32 %v1708, %v1710
    %v1712 = vadd.f32 %v1708, %v1711
    %vm1713 = vweird.f32 %v1693
    %vm1714 = vweird.f32 %v1708
    %vm1715 = vmor %vm1713, %vm1714
    %v1716 = vsel %vm1715, %v1708, %v1712
    %v1717 = vand.u32 2147483647, %v1693
    %vm1718 = vcmp.eq.f32.partialorder %v1717, 8.507059e+37
    %v1719 = vand.u32 %v1693, 2147483648
    %v1720 = vor.u32 1.1754944e-38, %v1719
    %v1721 = vsel %vm1718, %v1720, %v1716
    %v1722 = vperm.slane %v1707, 0
    %v1723 = vperm.slane %v1721, 0
    %v1724 = vmul.f32 %v1148, %v1722
    %v1725 = vmul.f32 %v1338, %v1723
    %v1726 = vmul.f32 %v1152, %v1722
    %v1727 = vmul.f32 %v1342, %v1723
    %1728 = vset.pattern.permute.xlu0 6
    %1729 = vperm.xlu0 %1728, %v17
    %v1730 = vpop.permute.xlu0 %1729
    %1732 = vset.pattern.permute.xlu0 6
    %1733 = vperm.xlu0 %1732, %v18
    %v1734 = vpop.permute.xlu0 %1733
    %v1736 = vmul.f32 %v1730, %v1724
    %v1737 = vmul.f32 %v1730, %v1725
    %v1738 = vmul.f32 %v1734, %v1726
    %v1739 = vmul.f32 %v1734, %v1727
    %v1740 = vmul.f32 %v1736, 0.5
    %v1741 = vmul.f32 %v1737, 0.5
    %v1742 = vmul.f32 %v1738, 0.5
    %v1743 = vmul.f32 %v1739, 0.5
    %v1744 = vtanh.pop %v1740
    %v1745 = vtanh.pop %v1741
    %v1746 = vtanh.pop %v1742
    %v1747 = vtanh.pop %v1743
    %v1748 = vadd.f32 %v1744, 1.0
    %v1749 = vadd.f32 %v1745, 1.0
    %v1750 = vadd.f32 %v1746, 1.0
    %v1751 = vadd.f32 %v1747, 1.0
    %v1752 = vmul.f32 %v1740, %v1748
    %v1753 = vmul.f32 %v1741, %v1749
    %v1754 = vmul.f32 %v1742, %v1750
    %v1755 = vmul.f32 %v1743, %v1751
    %1756 = vset.pattern.permute.xlu0 0
    %1757 = vperm.xlu0 %1756, %v20
    %v1758 = vpop.permute.xlu0 %1757
    %v1761 = vsel %vm148, %v19, 0
    %1763 = vmatpush.msra.mxu0 0.0
    %1764 = vmatpush.msra.mxu0 0.0
    %1765 = vmatpush.msra.mxu0 0.0
    %1766 = vmatpush.msra.mxu0 0.0
    %1767 = vmatpush.msra.mxu0 0.0
    %1768 = vmatpush.msra.mxu0 0.0
    %1769 = vmatpush.msra.mxu0 0.0
    %1770 = vmatpush.msra.mxu0 0.0
    %1771 = vmatpush.msra.mxu0 0.0
    %1772 = vmatpush.msra.mxu0 0.0
    %1773 = vmatpush.msra.mxu0 0.0
    %1774 = vmatpush.msra.mxu0 0.0
    %1775 = vmatpush.msra.mxu0 0.0
    %1776 = vmatpush.msra.mxu0 0.0
    %v1777 = vand.u32 %v1754, 4294901760
    %1778 = vmatpush.msra.mxu0 %v1777
    %v1779 = vand.u32 %v1752, 4294901760
    %1780 = vmatpush.msra.mxu0 %v1779
    %v1781 = vand.u32 %v1761, 4294901760
    %v1782 = vsub.f32 %v1761, %v1781
    %v1783 = vand.u32 %v1782, 4294901760
    %v1784 = vsub.f32 %v1782, %v1783
    %v1785 = vand.u32 %v1784, 4294901760
    %1786 = vmatmul.f32.gmra.mxu0 %v1785
    %v1787 = vpop.f32.mrf.mxu0
    %v1788 = vadd.f32 %v1758, %v1787
    %1789 = vdwg.mxu0
    %1790 = vmatpush.msra.mxu0 0.0
    %1791 = vmatpush.msra.mxu0 0.0
    %1792 = vmatpush.msra.mxu0 0.0
    %1793 = vmatpush.msra.mxu0 0.0
    %1794 = vmatpush.msra.mxu0 0.0
    %1795 = vmatpush.msra.mxu0 0.0
    %1796 = vmatpush.msra.mxu0 0.0
    %1797 = vmatpush.msra.mxu0 0.0
    %1798 = vmatpush.msra.mxu0 0.0
    %1799 = vmatpush.msra.mxu0 0.0
    %1800 = vmatpush.msra.mxu0 0.0
    %1801 = vmatpush.msra.mxu0 0.0
    %1802 = vmatpush.msra.mxu0 0.0
    %1803 = vmatpush.msra.mxu0 0.0
    %v1804 = vand.u32 %v1754, 4294901760
    %v1805 = vsub.f32 %v1754, %v1804
    %v1806 = vand.u32 %v1805, 4294901760
    %v1807 = vsub.f32 %v1805, %v1806
    %v1808 = vand.u32 %v1807, 4294901760
    %1809 = vmatpush.msra.mxu0 %v1808
    %v1810 = vand.u32 %v1752, 4294901760
    %v1811 = vsub.f32 %v1752, %v1810
    %v1812 = vand.u32 %v1811, 4294901760
    %v1813 = vsub.f32 %v1811, %v1812
    %v1814 = vand.u32 %v1813, 4294901760
    %1815 = vmatpush.msra.mxu0 %v1814
    %v1816 = vand.u32 %v1761, 4294901760
    %1817 = vmatmul.f32.gmra.mxu0 %v1816
    %v1818 = vpop.f32.mrf.mxu0
    %v1819 = vadd.f32 %v1788, %v1818
    %1820 = vdwg.mxu0
    %1821 = vmatpush.msra.mxu0 0.0
    %1822 = vmatpush.msra.mxu0 0.0
    %1823 = vmatpush.msra.mxu0 0.0
    %1824 = vmatpush.msra.mxu0 0.0
    %1825 = vmatpush.msra.mxu0 0.0
    %1826 = vmatpush.msra.mxu0 0.0
    %1827 = vmatpush.msra.mxu0 0.0
    %1828 = vmatpush.msra.mxu0 0.0
    %1829 = vmatpush.msra.mxu0 0.0
    %1830 = vmatpush.msra.mxu0 0.0
    %1831 = vmatpush.msra.mxu0 0.0
    %1832 = vmatpush.msra.mxu0 0.0
    %1833 = vmatpush.msra.mxu0 0.0
    %1834 = vmatpush.msra.mxu0 0.0
    %v1835 = vand.u32 %v1754, 4294901760
    %v1836 = vsub.f32 %v1754, %v1835
    %1837 = vmatpush.msra.mxu0 %v1836
    %v1838 = vand.u32 %v1752, 4294901760
    %v1839 = vsub.f32 %v1752, %v1838
    %1840 = vmatpush.msra.mxu0 %v1839
    %v1841 = vand.u32 %v1761, 4294901760
    %v1842 = vsub.f32 %v1761, %v1841
    %1843 = vmatmul.f32.gmra.mxu0 %v1842
    %v1844 = vpop.f32.mrf.mxu0
    %v1845 = vadd.f32 %v1819, %v1844
    %1846 = vdwg.mxu0
    %1847 = vmatpush.msra.mxu0 0.0
    %1848 = vmatpush.msra.mxu0 0.0
    %1849 = vmatpush.msra.mxu0 0.0
    %1850 = vmatpush.msra.mxu0 0.0
    %1851 = vmatpush.msra.mxu0 0.0
    %1852 = vmatpush.msra.mxu0 0.0
    %1853 = vmatpush.msra.mxu0 0.0
    %1854 = vmatpush.msra.mxu0 0.0
    %1855 = vmatpush.msra.mxu0 0.0
    %1856 = vmatpush.msra.mxu0 0.0
    %1857 = vmatpush.msra.mxu0 0.0
    %1858 = vmatpush.msra.mxu0 0.0
    %1859 = vmatpush.msra.mxu0 0.0
    %1860 = vmatpush.msra.mxu0 0.0
    %v1861 = vand.u32 %v1754, 4294901760
    %1862 = vmatpush.msra.mxu0 %v1861
    %v1863 = vand.u32 %v1752, 4294901760
    %1864 = vmatpush.msra.mxu0 %v1863
    %v1865 = vand.u32 %v1761, 4294901760
    %v1866 = vsub.f32 %v1761, %v1865
    %v1867 = vand.u32 %v1866, 4294901760
    %1868 = vmatmul.f32.gmra.mxu0 %v1867
    %v1869 = vpop.f32.mrf.mxu0
    %v1870 = vadd.f32 %v1845, %v1869
    %1871 = vdwg.mxu0
    %1872 = vmatpush.msra.mxu0 0.0
    %1873 = vmatpush.msra.mxu0 0.0
    %1874 = vmatpush.msra.mxu0 0.0
    %1875 = vmatpush.msra.mxu0 0.0
    %1876 = vmatpush.msra.mxu0 0.0
    %1877 = vmatpush.msra.mxu0 0.0
    %1878 = vmatpush.msra.mxu0 0.0
    %1879 = vmatpush.msra.mxu0 0.0
    %1880 = vmatpush.msra.mxu0 0.0
    %1881 = vmatpush.msra.mxu0 0.0
    %1882 = vmatpush.msra.mxu0 0.0
    %1883 = vmatpush.msra.mxu0 0.0
    %1884 = vmatpush.msra.mxu0 0.0
    %1885 = vmatpush.msra.mxu0 0.0
    %v1886 = vand.u32 %v1754, 4294901760
    %v1887 = vsub.f32 %v1754, %v1886
    %v1888 = vand.u32 %v1887, 4294901760
    %1889 = vmatpush.msra.mxu0 %v1888
    %v1890 = vand.u32 %v1752, 4294901760
    %v1891 = vsub.f32 %v1752, %v1890
    %v1892 = vand.u32 %v1891, 4294901760
    %1893 = vmatpush.msra.mxu0 %v1892
    %v1894 = vand.u32 %v1761, 4294901760
    %1895 = vmatmul.f32.gmra.mxu0 %v1894
    %v1896 = vpop.f32.mrf.mxu0
    %v1897 = vadd.f32 %v1870, %v1896
    %1898 = vdwg.mxu0
    %1899 = vmatpush.msra.mxu0 0.0
    %1900 = vmatpush.msra.mxu0 0.0
    %1901 = vmatpush.msra.mxu0 0.0
    %1902 = vmatpush.msra.mxu0 0.0
    %1903 = vmatpush.msra.mxu0 0.0
    %1904 = vmatpush.msra.mxu0 0.0
    %1905 = vmatpush.msra.mxu0 0.0
    %1906 = vmatpush.msra.mxu0 0.0
    %1907 = vmatpush.msra.mxu0 0.0
    %1908 = vmatpush.msra.mxu0 0.0
    %1909 = vmatpush.msra.mxu0 0.0
    %1910 = vmatpush.msra.mxu0 0.0
    %1911 = vmatpush.msra.mxu0 0.0
    %1912 = vmatpush.msra.mxu0 0.0
    %v1913 = vand.u32 %v1754, 4294901760
    %1914 = vmatpush.msra.mxu0 %v1913
    %v1915 = vand.u32 %v1752, 4294901760
    %1916 = vmatpush.msra.mxu0 %v1915
    %v1917 = vand.u32 %v1761, 4294901760
    %1918 = vmatmul.f32.gmra.mxu0 %v1917
    %v1919 = vpop.f32.mrf.mxu0
    %v1920 = vadd.f32 %v1897, %v1919
    %1921 = vdwg.mxu0
    %1922 = vmatpush.msra.mxu0 0.0
    %1923 = vmatpush.msra.mxu0 0.0
    %1924 = vmatpush.msra.mxu0 0.0
    %1925 = vmatpush.msra.mxu0 0.0
    %1926 = vmatpush.msra.mxu0 0.0
    %1927 = vmatpush.msra.mxu0 0.0
    %1928 = vmatpush.msra.mxu0 0.0
    %1929 = vmatpush.msra.mxu0 0.0
    %1930 = vmatpush.msra.mxu0 0.0
    %1931 = vmatpush.msra.mxu0 0.0
    %1932 = vmatpush.msra.mxu0 0.0
    %1933 = vmatpush.msra.mxu0 0.0
    %1934 = vmatpush.msra.mxu0 0.0
    %1935 = vmatpush.msra.mxu0 0.0
    %v1936 = vand.u32 %v1755, 4294901760
    %1937 = vmatpush.msra.mxu0 %v1936
    %v1938 = vand.u32 %v1753, 4294901760
    %1939 = vmatpush.msra.mxu0 %v1938
    %v1940 = vand.u32 %v1761, 4294901760
    %v1941 = vsub.f32 %v1761, %v1940
    %v1942 = vand.u32 %v1941, 4294901760
    %v1943 = vsub.f32 %v1941, %v1942
    %v1944 = vand.u32 %v1943, 4294901760
    %1945 = vmatmul.f32.gmra.mxu0 %v1944
    %v1946 = vpop.f32.mrf.mxu0
    %v1947 = vadd.f32 %v1758, %v1946
    %1948 = vdwg.mxu0
    %1949 = vmatpush.msra.mxu0 0.0
    %1950 = vmatpush.msra.mxu0 0.0
    %1951 = vmatpush.msra.mxu0 0.0
    %1952 = vmatpush.msra.mxu0 0.0
    %1953 = vmatpush.msra.mxu0 0.0
    %1954 = vmatpush.msra.mxu0 0.0
    %1955 = vmatpush.msra.mxu0 0.0
    %1956 = vmatpush.msra.mxu0 0.0
    %1957 = vmatpush.msra.mxu0 0.0
    %1958 = vmatpush.msra.mxu0 0.0
    %1959 = vmatpush.msra.mxu0 0.0
    %1960 = vmatpush.msra.mxu0 0.0
    %1961 = vmatpush.msra.mxu0 0.0
    %1962 = vmatpush.msra.mxu0 0.0
    %v1963 = vand.u32 %v1755, 4294901760
    %v1964 = vsub.f32 %v1755, %v1963
    %v1965 = vand.u32 %v1964, 4294901760
    %v1966 = vsub.f32 %v1964, %v1965
    %v1967 = vand.u32 %v1966, 4294901760
    %1968 = vmatpush.msra.mxu0 %v1967
    %v1969 = vand.u32 %v1753, 4294901760
    %v1970 = vsub.f32 %v1753, %v1969
    %v1971 = vand.u32 %v1970, 4294901760
    %v1972 = vsub.f32 %v1970, %v1971
    %v1973 = vand.u32 %v1972, 4294901760
    %1974 = vmatpush.msra.mxu0 %v1973
    %v1975 = vand.u32 %v1761, 4294901760
    %1976 = vmatmul.f32.gmra.mxu0 %v1975
    %v1977 = vpop.f32.mrf.mxu0
    %v1978 = vadd.f32 %v1947, %v1977
    %1979 = vdwg.mxu0
    %1980 = vmatpush.msra.mxu0 0.0
    %1981 = vmatpush.msra.mxu0 0.0
    %1982 = vmatpush.msra.mxu0 0.0
    %1983 = vmatpush.msra.mxu0 0.0
    %1984 = vmatpush.msra.mxu0 0.0
    %1985 = vmatpush.msra.mxu0 0.0
    %1986 = vmatpush.msra.mxu0 0.0
    %1987 = vmatpush.msra.mxu0 0.0
    %1988 = vmatpush.msra.mxu0 0.0
    %1989 = vmatpush.msra.mxu0 0.0
    %1990 = vmatpush.msra.mxu0 0.0
    %1991 = vmatpush.msra.mxu0 0.0
    %1992 = vmatpush.msra.mxu0 0.0
    %1993 = vmatpush.msra.mxu0 0.0
    %v1994 = vand.u32 %v1755, 4294901760
    %v1995 = vsub.f32 %v1755, %v1994
    %1996 = vmatpush.msra.mxu0 %v1995
    %v1997 = vand.u32 %v1753, 4294901760
    %v1998 = vsub.f32 %v1753, %v1997
    %1999 = vmatpush.msra.mxu0 %v1998
    %v2000 = vand.u32 %v1761, 4294901760
    %v2001 = vsub.f32 %v1761, %v2000
    %2002 = vmatmul.f32.gmra.mxu0 %v2001
    %v2003 = vpop.f32.mrf.mxu0
    %v2004 = vadd.f32 %v1978, %v2003
    %2005 = vdwg.mxu0
    %2006 = vmatpush.msra.mxu0 0.0
    %2007 = vmatpush.msra.mxu0 0.0
    %2008 = vmatpush.msra.mxu0 0.0
    %2009 = vmatpush.msra.mxu0 0.0
    %2010 = vmatpush.msra.mxu0 0.0
    %2011 = vmatpush.msra.mxu0 0.0
    %2012 = vmatpush.msra.mxu0 0.0
    %2013 = vmatpush.msra.mxu0 0.0
    %2014 = vmatpush.msra.mxu0 0.0
    %2015 = vmatpush.msra.mxu0 0.0
    %2016 = vmatpush.msra.mxu0 0.0
    %2017 = vmatpush.msra.mxu0 0.0
    %2018 = vmatpush.msra.mxu0 0.0
    %2019 = vmatpush.msra.mxu0 0.0
    %v2020 = vand.u32 %v1755, 4294901760
    %2021 = vmatpush.msra.mxu0 %v2020
    %v2022 = vand.u32 %v1753, 4294901760
    %2023 = vmatpush.msra.mxu0 %v2022
    %v2024 = vand.u32 %v1761, 4294901760
    %v2025 = vsub.f32 %v1761, %v2024
    %v2026 = vand.u32 %v2025, 4294901760
    %2027 = vmatmul.f32.gmra.mxu0 %v2026
    %v2028 = vpop.f32.mrf.mxu0
    %v2029 = vadd.f32 %v2004, %v2028
    %2030 = vdwg.mxu0
    %2031 = vmatpush.msra.mxu0 0.0
    %2032 = vmatpush.msra.mxu0 0.0
    %2033 = vmatpush.msra.mxu0 0.0
    %2034 = vmatpush.msra.mxu0 0.0
    %2035 = vmatpush.msra.mxu0 0.0
    %2036 = vmatpush.msra.mxu0 0.0
    %2037 = vmatpush.msra.mxu0 0.0
    %2038 = vmatpush.msra.mxu0 0.0
    %2039 = vmatpush.msra.mxu0 0.0
    %2040 = vmatpush.msra.mxu0 0.0
    %2041 = vmatpush.msra.mxu0 0.0
    %2042 = vmatpush.msra.mxu0 0.0
    %2043 = vmatpush.msra.mxu0 0.0
    %2044 = vmatpush.msra.mxu0 0.0
    %v2045 = vand.u32 %v1755, 4294901760
    %v2046 = vsub.f32 %v1755, %v2045
    %v2047 = vand.u32 %v2046, 4294901760
    %2048 = vmatpush.msra.mxu0 %v2047
    %v2049 = vand.u32 %v1753, 4294901760
    %v2050 = vsub.f32 %v1753, %v2049
    %v2051 = vand.u32 %v2050, 4294901760
    %2052 = vmatpush.msra.mxu0 %v2051
    %v2053 = vand.u32 %v1761, 4294901760
    %2054 = vmatmul.f32.gmra.mxu0 %v2053
    %v2055 = vpop.f32.mrf.mxu0
    %v2056 = vadd.f32 %v2029, %v2055
    %2057 = vdwg.mxu0
    %2058 = vmatpush.msra.mxu0 0.0
    %2059 = vmatpush.msra.mxu0 0.0
    %2060 = vmatpush.msra.mxu0 0.0
    %2061 = vmatpush.msra.mxu0 0.0
    %2062 = vmatpush.msra.mxu0 0.0
    %2063 = vmatpush.msra.mxu0 0.0
    %2064 = vmatpush.msra.mxu0 0.0
    %2065 = vmatpush.msra.mxu0 0.0
    %2066 = vmatpush.msra.mxu0 0.0
    %2067 = vmatpush.msra.mxu0 0.0
    %2068 = vmatpush.msra.mxu0 0.0
    %2069 = vmatpush.msra.mxu0 0.0
    %2070 = vmatpush.msra.mxu0 0.0
    %2071 = vmatpush.msra.mxu0 0.0
    %v2072 = vand.u32 %v1755, 4294901760
    %2073 = vmatpush.msra.mxu0 %v2072
    %v2074 = vand.u32 %v1753, 4294901760
    %2075 = vmatpush.msra.mxu0 %v2074
    %v2076 = vand.u32 %v1761, 4294901760
    %2077 = vmatmul.f32.gmra.mxu0 %v2076
    %v2078 = vpop.f32.mrf.mxu0
    %v2079 = vadd.f32 %v2056, %v2078
    %2080 = vdwg.mxu0
    %v2081 = vmul.f32 %v1920, 0.5
    %v2082 = vmul.f32 %v2079, 0.5
    %v2083 = vtanh.pop %v2081
    %v2084 = vtanh.pop %v2082
    %v2085 = vadd.f32 %v2083, 1.0
    %v2086 = vadd.f32 %v2084, 1.0
    %v2087 = vmul.f32 %v2081, %v2085
    %v2088 = vmul.f32 %v2082, %v2086
    %v2091 = vrot.slane %v2088, 7
    %vm2092 = vcmask 1040384
    %v2093 = vsel %vm2092, %v2087, %v2091
    %v2095 = vlaneseq
    %vm2096 = vcmp.ge.s32.totalorder %v2095, 0
    %vm2097 = vcmp.lt.s32.totalorder %v2095, 256
    %vm2098 = vmand %vm2096, %vm2097
    %2099 = vst.msk [vmem:[#allocation2] sm:$0x3] %vm2098, %v2093
    // Predicated region
    $region10: #{tpu_custom_call.1} parent=1 // pred_check
      _
    $region11: #{tpu_custom_call.1} parent=1 // pred_check_branch
      %2101 = sbr.rel (0) target = $region13
    $region12: #{tpu_custom_call.1} parent=1 // pred_region
      %2103 = vsyncadd [#allocation3], 0
      %s2105 = sshll.u32 [#allocation2], 4
      %s2106 = int_to_ptr.vmem [resolvable:$true] %s2105
      %s2107 = sshll.u32 %s2, 4
      %s2108 = int_to_ptr.hbm [resolvable:$true] %s2107
      %2110 = dma.vmem_to_hbm [thread:$0]  %s2106, 32, %s2108, [#allocation3]
    $region13: #{tpu_custom_call.1} parent=1 // pred_fallthru
      _
    // Predicated region
    $region14: #{tpu_custom_call.1} parent=1 // pred_check
      _
    $region15: #{tpu_custom_call.1} parent=1 // pred_check_branch
      %2112 = sbr.rel (0) target = $region17
    $region16: #{tpu_custom_call.1} parent=1 // pred_region
      %2114 = dma.done [#allocation3], 32
    $region17: #{tpu_custom_call.1} parent=1 // pred_fallthru
      _
    %2115 = vsyncpa [#allocation3], 1

</llo_original>
